<compile_context>
chip_gen: v7x
topology: tpu7x:2x2x1
jax: 0.10.0
libtpu: 0.0.40
codegen_flags: <defaults>
</compile_context>

<pallas_src>
import jax
import jax.numpy as jnp
from jax import lax
from jax.experimental import pallas as pl
from jax.experimental.pallas import tpu as pltpu

LANGS = ("en", "fr", "de", "es", "it")
EPS = 1e-5  # PyTorch LayerNorm default eps


def _layernorm(x, gamma, beta):
    mu = jnp.mean(x, axis=-1, keepdims=True)
    var = jnp.mean((x - mu) ** 2, axis=-1, keepdims=True)
    return (x - mu) * lax.rsqrt(var + EPS) * gamma + beta


def topic_branch_kernel(
    lang_ref,                                                  # scalar prefetch (SMEM), used by index_maps
    seq_ref, attn_ref, lda_ref,                                # (tile_s,H), (tile_s,1), (1,T)
    aw1_ref, ab1_ref, ag_ref, abt_ref, aw2_ref, ab2_ref,       # selected-language adapter
    wfh_ref, wft_ref, bf_ref, fg_ref, fb_ref,                  # topic_fusion (wf pre-split)
    wp1_ref, bp1_ref, pg_ref, pb_ref, wp2_ref, bp2_ref,        # prototype projector
    wc_ref, bc_ref,                                            # topic classifier
    topic_ref, proto_ref, logits_ref,                          # (1,TH), (1,P), (1,T)
    pooled_acc, cnt_acc,                                       # VMEM scratch (1,H), (1,1)
):
    s = pl.program_id(1)

    @pl.when(s == 0)
    def _():
        pooled_acc[...] = jnp.zeros_like(pooled_acc)
        cnt_acc[...] = jnp.zeros_like(cnt_acc)

    # ---- selected-language adapter: Linear -> LayerNorm -> ReLU -> Linear ----
    x = seq_ref[...]                                           # (tile_s, H), native dtype (bf16 ok)
    h = jnp.dot(x, aw1_ref[...], preferred_element_type=jnp.float32) + ab1_ref[...]
    h = _layernorm(h, ag_ref[...], abt_ref[...])
    h = jnp.maximum(h, 0.0)
    h = jnp.dot(h, aw2_ref[...], preferred_element_type=jnp.float32) + ab2_ref[...]

    # ---- masked-sum pooling partial: (1,tile_s) x (tile_s,H) MXU contraction ----
    attn_t = attn_ref[...].astype(jnp.float32)                 # (tile_s, 1)
    part = lax.dot_general(attn_t, h,
                           dimension_numbers=(((0,), (0,)), ((), ())),
                           preferred_element_type=jnp.float32)  # (1, H)
    pooled_acc[...] += part
    cnt_acc[...] += jnp.sum(attn_t, keepdims=True)             # (1, 1)

    # ---- epilogue: fusion + projector + classifier on the pooled vector ----
    @pl.when(s == pl.num_programs(1) - 1)
    def _():
        denom = jnp.maximum(cnt_acc[...], 1e-6)                # guard fully-masked rows
        pooled = pooled_acc[...] / denom                       # (1, H)
        lda = lda_ref[...].astype(jnp.float32)                 # (1, T)

        # topic_fusion on concat([pooled, lda]) as a split matmul
        tf = (jnp.dot(pooled, wfh_ref[...], preferred_element_type=jnp.float32)
              + jnp.dot(lda, wft_ref[...], preferred_element_type=jnp.float32)
              + bf_ref[...])
        tf = jnp.maximum(_layernorm(tf, fg_ref[...], fb_ref[...]), 0.0)   # Dropout = id (eval)
        topic_ref[...] = tf.astype(topic_ref.dtype)

        # prototype projector: Linear -> LayerNorm -> ReLU -> (Dropout) -> Linear
        p = jnp.dot(tf, wp1_ref[...], preferred_element_type=jnp.float32) + bp1_ref[...]
        p = jnp.maximum(_layernorm(p, pg_ref[...], pb_ref[...]), 0.0)
        p = jnp.dot(p, wp2_ref[...], preferred_element_type=jnp.float32) + bp2_ref[...]
        proto_ref[...] = p.astype(proto_ref.dtype)

        # topic classifier (support_set is None path)
        logits_ref[...] = (jnp.dot(p, wc_ref[...], preferred_element_type=jnp.float32)
                           + bc_ref[...]).astype(logits_ref.dtype)


def topic_branch_forward(seq, attn_mask, language_ids, lda_feats, params, *, tile_s=None):
    B, S, H = seq.shape
    T = lda_feats.shape[-1]
    TH = params["wf"].shape[1]
    P = params["wp1"].shape[1]

    if tile_s is None:
        tile_s = S if S <= 256 else 256
    assert S % tile_s == 0 and (tile_s % 8 == 0 or tile_s == S), "bad seq tile"

    lang_ids = language_ids.astype(jnp.int32)                  # [B] scalar prefetch
    attn3 = attn_mask.astype(jnp.float32)[:, :, None]          # [B, S, 1]
    lda3 = lda_feats.astype(jnp.float32)[:, None, :]           # [B, 1, T]

    r_bias = lambda a: a.reshape(a.shape[0], 1, a.shape[1])    # [L,D] -> [L,1,D]
    r_row = lambda a: a.reshape(1, -1)                         # [D]   -> [1,D]
    wf_h = params["wf"][:H, :]                                 # split concat-matmul weight
    wf_t = params["wf"][H:, :]

    lang_sel_w = lambda b, s, lang: (lang[b], 0, 0)            # per-example adapter weight select
    const2 = lambda b, s, lang: (0, 0)

    in_specs = (
        pl.BlockSpec((None, tile_s, H), lambda b, s, lang: (b, s, 0)),   # seq
        pl.BlockSpec((None, tile_s, 1), lambda b, s, lang: (b, s, 0)),   # attn
        pl.BlockSpec((None, 1, T), lambda b, s, lang: (b, 0, 0)),        # lda
        pl.BlockSpec((None, H, H), lang_sel_w),                          # aw1
        pl.BlockSpec((None, 1, H), lang_sel_w),                          # ab1
        pl.BlockSpec((None, 1, H), lang_sel_w),                          # ag
        pl.BlockSpec((None, 1, H), lang_sel_w),                          # abt
        pl.BlockSpec((None, H, H), lang_sel_w),                          # aw2
        pl.BlockSpec((None, 1, H), lang_sel_w),                          # ab2
        pl.BlockSpec((H, TH), const2),                                   # wf_h
        pl.BlockSpec((T, TH), const2),                                   # wf_t
        pl.BlockSpec((1, TH), const2),                                   # bf
        pl.BlockSpec((1, TH), const2),                                   # fg
        pl.BlockSpec((1, TH), const2),                                   # fb
        pl.BlockSpec((TH, P), const2),                                   # wp1
        pl.BlockSpec((1, P), const2),                                    # bp1
        pl.BlockSpec((1, P), const2),                                    # pg
        pl.BlockSpec((1, P), const2),                                    # pb
        pl.BlockSpec((P, P), const2),                                    # wp2
        pl.BlockSpec((1, P), const2),                                    # bp2
        pl.BlockSpec((P, T), const2),                                    # wc
        pl.BlockSpec((1, T), const2),                                    # bc
    )
    out_specs = (
        pl.BlockSpec((None, 1, TH), lambda b, s, lang: (b, 0, 0)),
        pl.BlockSpec((None, 1, P), lambda b, s, lang: (b, 0, 0)),
        pl.BlockSpec((None, 1, T), lambda b, s, lang: (b, 0, 0)),
    )
    out_shapes = (
        jax.ShapeDtypeStruct((B, 1, TH), jnp.float32),
        jax.ShapeDtypeStruct((B, 1, P), jnp.float32),
        jax.ShapeDtypeStruct((B, 1, T), jnp.float32),
    )

    topic, proto, logits = pl.pallas_call(
        topic_branch_kernel,
        out_shape=out_shapes,
        grid_spec=pltpu.PrefetchScalarGridSpec(
            num_scalar_prefetch=1,
            grid=(B, S // tile_s),
            in_specs=in_specs,
            out_specs=out_specs,
            scratch_shapes=[pltpu.VMEM((1, H), jnp.float32),
                            pltpu.VMEM((1, 1), jnp.float32)],
        ),
        compiler_params=pltpu.CompilerParams(
            dimension_semantics=("parallel", "arbitrary"),
            vmem_limit_bytes=64 * 1024 * 1024,
        ),
    )(lang_ids, seq, attn3, lda3,
      params["aw1"], r_bias(params["ab1"]), r_bias(params["ag"]), r_bias(params["abt"]),
      params["aw2"], r_bias(params["ab2"]),
      wf_h, wf_t, r_row(params["bf"]), r_row(params["fg"]), r_row(params["fb"]),
      params["wp1"], r_row(params["bp1"]), r_row(params["pg"]), r_row(params["pb"]),
      params["wp2"], r_row(params["bp2"]),
      params["wc"], r_row(params["bc"]))

    return {"topic_features": topic[:, 0, :],
            "prototype_features": proto[:, 0, :],
            "logits": logits[:, 0, :]}


# ---------------- pure-JAX reference (for correctness check) ----------------
def reference_forward(seq, attn_mask, language_ids, lda_feats, params):
    L = params["aw1"].shape[0]
    adapted = jnp.zeros(seq.shape, jnp.float32)
    for l in range(L):
        h = seq.astype(jnp.float32) @ params["aw1"][l] + params["ab1"][l]
        h = _layernorm(h, params["ag"][l], params["abt"][l])
        h = jnp.maximum(h, 0.0)
        h = h @ params["aw2"][l] + params["ab2"][l]
        lm = (language_ids == l).astype(jnp.float32)[:, None, None]
        adapted = adapted + lm * h
    attn = attn_mask.astype(jnp.float32)
    pooled = (adapted * attn[:, :, None]).sum(1) / attn.sum(1, keepdims=True)
    combined = jnp.concatenate([pooled, lda_feats.astype(jnp.float32)], axis=-1)
    tf = combined @ params["wf"] + params["bf"]
    tf = jnp.maximum(_layernorm(tf, params["fg"], params["fb"]), 0.0)
    p = tf @ params["wp1"] + params["bp1"]
    p = jnp.maximum(_layernorm(p, params["pg"], params["pb"]), 0.0)
    p = p @ params["wp2"] + params["bp2"]
    logits = p @ params["wc"] + params["bc"]
    return {"topic_features": tf, "prototype_features": p, "logits": logits}


def init_params(key, H, T, TH, P, L):
    ks = jax.random.split(key, 12)
    w = lambda k, shape, s=0.05: jax.random.normal(k, shape, jnp.float32) * s
    return dict(
        aw1=w(ks[0], (L, H, H)), ab1=w(ks[1], (L, H)),
        ag=jnp.ones((L, H), jnp.float32), abt=jnp.zeros((L, H), jnp.float32),
        aw2=w(ks[2], (L, H, H)), ab2=w(ks[3], (L, H)),
        wf=w(ks[4], (H + T, TH)), bf=w(ks[5], (TH,)),
        fg=jnp.ones((TH,), jnp.float32), fb=jnp.zeros((TH,), jnp.float32),
        wp1=w(ks[6], (TH, P)), bp1=w(ks[7], (P,)),
        pg=jnp.ones((P,), jnp.float32), pb=jnp.zeros((P,), jnp.float32),
        wp2=w(ks[8], (P, P)), bp2=w(ks[9], (P,)),
        wc=w(ks[10], (P, T)), bc=w(ks[11], (T,)),
    )


if __name__ == "__main__":
    # small config: hidden_size=32, num_topics=8, topic_hidden_size=32, prototype_dim=32
    B, S, H = 2, 16, 32
    T, TH, P = 8, 32, 32
    L = len(LANGS)

    key = jax.random.PRNGKey(0)
    k1, k2, k3, kp = jax.random.split(key, 4)
    seq = jax.random.normal(k1, (B, S, H), jnp.float32)
    attn = jnp.ones((B, S), jnp.float32).at[1, 12:].set(0.0)      # ragged attention mask
    language_ids = jax.random.randint(k2, (B,), 0, L)
    lda_raw = jax.random.uniform(k3, (B, T), jnp.float32)
    lda = lda_raw / lda_raw.sum(-1, keepdims=True)                # topic distributions
    params = init_params(kp, H, T, TH, P, L)

    out = topic_branch_forward(seq, attn, language_ids, lda, params, tile_s=8)
    jax.block_until_ready(out)

    ref = reference_forward(seq, attn, language_ids, lda, params)
    for name in ("topic_features", "prototype_features", "logits"):
        assert jnp.allclose(out[name], ref[name], atol=1e-4, rtol=1e-4), name

    print("KERNEL_OK")
</pallas_src>

<mosaic_0001>
module attributes {stable_mosaic.version = 11 : i64} {
  func.func @topic_branch_kernel(%arg0: i32, %arg1: i32, %arg2: memref<2xi32, #tpu.memory_space<smem>>, %arg3: memref<1x8x32xf32, #tpu.memory_space<vmem>>, %arg4: memref<1x8x1xf32, #tpu.memory_space<vmem>>, %arg5: memref<1x1x8xf32, #tpu.memory_space<vmem>>, %arg6: memref<1x32x32xf32, #tpu.memory_space<vmem>>, %arg7: memref<1x1x32xf32, #tpu.memory_space<vmem>>, %arg8: memref<1x1x32xf32, #tpu.memory_space<vmem>>, %arg9: memref<1x1x32xf32, #tpu.memory_space<vmem>>, %arg10: memref<1x32x32xf32, #tpu.memory_space<vmem>>, %arg11: memref<1x1x32xf32, #tpu.memory_space<vmem>>, %arg12: memref<32x32xf32, #tpu.memory_space<vmem>>, %arg13: memref<8x32xf32, #tpu.memory_space<vmem>>, %arg14: memref<1x32xf32, #tpu.memory_space<vmem>>, %arg15: memref<1x32xf32, #tpu.memory_space<vmem>>, %arg16: memref<1x32xf32, #tpu.memory_space<vmem>>, %arg17: memref<32x32xf32, #tpu.memory_space<vmem>>, %arg18: memref<1x32xf32, #tpu.memory_space<vmem>>, %arg19: memref<1x32xf32, #tpu.memory_space<vmem>>, %arg20: memref<1x32xf32, #tpu.memory_space<vmem>>, %arg21: memref<32x32xf32, #tpu.memory_space<vmem>>, %arg22: memref<1x32xf32, #tpu.memory_space<vmem>>, %arg23: memref<32x8xf32, #tpu.memory_space<vmem>>, %arg24: memref<1x8xf32, #tpu.memory_space<vmem>>, %arg25: memref<1x1x32xf32, #tpu.memory_space<vmem>>, %arg26: memref<1x1x32xf32, #tpu.memory_space<vmem>>, %arg27: memref<1x1x8xf32, #tpu.memory_space<vmem>>, %arg28: memref<1x32xf32, #tpu.memory_space<vmem>>, %arg29: memref<1x1xf32, #tpu.memory_space<vmem>>) attributes {dimension_semantics = [#tpu.dimension_semantics<parallel>, #tpu.dimension_semantics<arbitrary>], iteration_bounds = array<i64: 2, 2>, scalar_prefetch = 1 : i64, scratch_operands = 2 : i64, tpu.core_type = #tpu.core_type<tc>, window_params = [{transform_indices = @transform_0, window_bounds = array<i64: 1, 8, 32>}, {transform_indices = @transform_1, window_bounds = array<i64: 1, 8, 1>}, {transform_indices = @transform_2, window_bounds = array<i64: 1, 1, 8>}, {transform_indices = @transform_3, window_bounds = array<i64: 1, 32, 32>}, {transform_indices = @transform_4, window_bounds = array<i64: 1, 1, 32>}, {transform_indices = @transform_5, window_bounds = array<i64: 1, 1, 32>}, {transform_indices = @transform_6, window_bounds = array<i64: 1, 1, 32>}, {transform_indices = @transform_7, window_bounds = array<i64: 1, 32, 32>}, {transform_indices = @transform_8, window_bounds = array<i64: 1, 1, 32>}, {pipeline_mode = #tpu.pipeline_mode<synchronous>, transform_indices = @transform_9, window_bounds = array<i64: 32, 32>}, {pipeline_mode = #tpu.pipeline_mode<synchronous>, transform_indices = @transform_10, window_bounds = array<i64: 8, 32>}, {pipeline_mode = #tpu.pipeline_mode<synchronous>, transform_indices = @transform_11, window_bounds = array<i64: 1, 32>}, {pipeline_mode = #tpu.pipeline_mode<synchronous>, transform_indices = @transform_12, window_bounds = array<i64: 1, 32>}, {pipeline_mode = #tpu.pipeline_mode<synchronous>, transform_indices = @transform_13, window_bounds = array<i64: 1, 32>}, {pipeline_mode = #tpu.pipeline_mode<synchronous>, transform_indices = @transform_14, window_bounds = array<i64: 32, 32>}, {pipeline_mode = #tpu.pipeline_mode<synchronous>, transform_indices = @transform_15, window_bounds = array<i64: 1, 32>}, {pipeline_mode = #tpu.pipeline_mode<synchronous>, transform_indices = @transform_16, window_bounds = array<i64: 1, 32>}, {pipeline_mode = #tpu.pipeline_mode<synchronous>, transform_indices = @transform_17, window_bounds = array<i64: 1, 32>}, {pipeline_mode = #tpu.pipeline_mode<synchronous>, transform_indices = @transform_18, window_bounds = array<i64: 32, 32>}, {pipeline_mode = #tpu.pipeline_mode<synchronous>, transform_indices = @transform_19, window_bounds = array<i64: 1, 32>}, {pipeline_mode = #tpu.pipeline_mode<synchronous>, transform_indices = @transform_20, window_bounds = array<i64: 32, 8>}, {pipeline_mode = #tpu.pipeline_mode<synchronous>, transform_indices = @transform_21, window_bounds = array<i64: 1, 8>}, {transform_indices = @transform_22, window_bounds = array<i64: 1, 1, 32>}, {transform_indices = @transform_23, window_bounds = array<i64: 1, 1, 32>}, {transform_indices = @transform_24, window_bounds = array<i64: 1, 1, 8>}]} {
    %c0_i32 = arith.constant 0 : i32
    %0 = arith.cmpi eq, %arg1, %c0_i32 : i32
    %1 = arith.extui %0 : i1 to i32
    %c0_i32_0 = arith.constant 0 : i32
    %2 = arith.cmpi ne, %1, %c0_i32_0 : i32
    scf.if %2 {
      %cst_42 = arith.constant 0.000000e+00 : f32
      %64 = vector.broadcast %cst_42 : f32 to vector<1x32xf32>
      %c0_43 = arith.constant 0 : index
      %c0_44 = arith.constant 0 : index
      %65 = vector.load %arg28[%c0_43, %c0_44] : memref<1x32xf32, #tpu.memory_space<vmem>>, vector<1x32xf32>
      tpu.vector_store %arg28[%c0_43, %c0_44], %64 {strides = array<i32>} : memref<1x32xf32, #tpu.memory_space<vmem>>, vector<1x32xf32>,
      %cst_45 = arith.constant 0.000000e+00 : f32
      %66 = vector.broadcast %cst_45 : f32 to vector<1x1xf32>
      %c0_46 = arith.constant 0 : index
      %c0_47 = arith.constant 0 : index
      %67 = vector.load %arg29[%c0_46, %c0_47] : memref<1x1xf32, #tpu.memory_space<vmem>>, vector<1x1xf32>
      tpu.vector_store %arg29[%c0_46, %c0_47], %66 {strides = array<i32>} : memref<1x1xf32, #tpu.memory_space<vmem>>, vector<1x1xf32>,
    } else {
    }
    %c0 = arith.constant 0 : index
    %c0_1 = arith.constant 0 : index
    %c0_2 = arith.constant 0 : index
    %3 = vector.load %arg3[%c0, %c0_1, %c0_2] : memref<1x8x32xf32, #tpu.memory_space<vmem>>, vector<1x8x32xf32>
    %4 = vector.shape_cast %3 : vector<1x8x32xf32> to vector<8x32xf32>
    %c0_3 = arith.constant 0 : index
    %c0_4 = arith.constant 0 : index
    %c0_5 = arith.constant 0 : index
    %5 = vector.load %arg6[%c0_3, %c0_4, %c0_5] : memref<1x32x32xf32, #tpu.memory_space<vmem>>, vector<1x32x32xf32>
    %6 = vector.shape_cast %5 : vector<1x32x32xf32> to vector<32x32xf32>
    %cst = arith.constant dense<0.000000e+00> : vector<8x32xf32>
    %7 = tpu.matmul %4, %6, %cst {dimension_numbers = #tpu.dot_dimension_numbers<[1], [0], [0], [1], [0, 0, 1, 1], [], []>} : vector<8x32xf32>, vector<32x32xf32>, vector<8x32xf32> -> vector<8x32xf32>
    %c0_6 = arith.constant 0 : index
    %c0_7 = arith.constant 0 : index
    %c0_8 = arith.constant 0 : index
    %8 = vector.load %arg7[%c0_6, %c0_7, %c0_8] : memref<1x1x32xf32, #tpu.memory_space<vmem>>, vector<1x1x32xf32>
    %9 = vector.shape_cast %8 : vector<1x1x32xf32> to vector<1x32xf32>
    %10 = vector.broadcast %9 : vector<1x32xf32> to vector<8x32xf32>
    %11 = arith.addf %7, %10 : vector<8x32xf32>
    %c0_9 = arith.constant 0 : index
    %c0_10 = arith.constant 0 : index
    %c0_11 = arith.constant 0 : index
    %12 = vector.load %arg8[%c0_9, %c0_10, %c0_11] : memref<1x1x32xf32, #tpu.memory_space<vmem>>, vector<1x1x32xf32>
    %13 = vector.shape_cast %12 : vector<1x1x32xf32> to vector<1x32xf32>
    %c0_12 = arith.constant 0 : index
    %c0_13 = arith.constant 0 : index
    %c0_14 = arith.constant 0 : index
    %14 = vector.load %arg9[%c0_12, %c0_13, %c0_14] : memref<1x1x32xf32, #tpu.memory_space<vmem>>, vector<1x1x32xf32>
    %15 = vector.shape_cast %14 : vector<1x1x32xf32> to vector<1x32xf32>
    %cst_15 = arith.constant dense<0.000000e+00> : vector<8xf32>
    %16 = vector.multi_reduction <add>, %11, %cst_15 [1] : vector<8x32xf32> to vector<8xf32>
    %17 = vector.shape_cast %16 : vector<8xf32> to vector<8x1xf32>
    %cst_16 = arith.constant 3.200000e+01 : f32
    %18 = vector.broadcast %cst_16 : f32 to vector<8x1xf32>
    %19 = arith.divf %17, %18 : vector<8x1xf32>
    %20 = vector.broadcast %19 : vector<8x1xf32> to vector<8x32xf32>
    %21 = arith.subf %11, %20 : vector<8x32xf32>
    %22 = arith.mulf %21, %21 : vector<8x32xf32>
    %cst_17 = arith.constant dense<0.000000e+00> : vector<8xf32>
    %23 = vector.multi_reduction <add>, %22, %cst_17 [1] : vector<8x32xf32> to vector<8xf32>
    %24 = vector.shape_cast %23 : vector<8xf32> to vector<8x1xf32>
    %cst_18 = arith.constant 3.200000e+01 : f32
    %25 = vector.broadcast %cst_18 : f32 to vector<8x1xf32>
    %26 = arith.divf %24, %25 : vector<8x1xf32>
    %27 = vector.broadcast %19 : vector<8x1xf32> to vector<8x32xf32>
    %28 = arith.subf %11, %27 : vector<8x32xf32>
    %cst_19 = arith.constant 9.99999974E-6 : f32
    %29 = vector.broadcast %cst_19 : f32 to vector<8x1xf32>
    %30 = arith.addf %26, %29 : vector<8x1xf32>
    %31 = math.rsqrt %30 : vector<8x1xf32>
    %32 = vector.broadcast %31 : vector<8x1xf32> to vector<8x32xf32>
    %33 = arith.mulf %28, %32 : vector<8x32xf32>
    %34 = vector.broadcast %13 : vector<1x32xf32> to vector<8x32xf32>
    %35 = arith.mulf %33, %34 : vector<8x32xf32>
    %36 = vector.broadcast %15 : vector<1x32xf32> to vector<8x32xf32>
    %37 = arith.addf %35, %36 : vector<8x32xf32>
    %cst_20 = arith.constant 0.000000e+00 : f32
    %38 = vector.broadcast %cst_20 : f32 to vector<8x32xf32>
    %39 = arith.maximumf %37, %38 : vector<8x32xf32>
    %c0_21 = arith.constant 0 : index
    %c0_22 = arith.constant 0 : index
    %c0_23 = arith.constant 0 : index
    %40 = vector.load %arg10[%c0_21, %c0_22, %c0_23] : memref<1x32x32xf32, #tpu.memory_space<vmem>>, vector<1x32x32xf32>
    %41 = vector.shape_cast %40 : vector<1x32x32xf32> to vector<32x32xf32>
    %cst_24 = arith.constant dense<0.000000e+00> : vector<8x32xf32>
    %42 = tpu.matmul %39, %41, %cst_24 {dimension_numbers = #tpu.dot_dimension_numbers<[1], [0], [0], [1], [0, 0, 1, 1], [], []>} : vector<8x32xf32>, vector<32x32xf32>, vector<8x32xf32> -> vector<8x32xf32>
    %c0_25 = arith.constant 0 : index
    %c0_26 = arith.constant 0 : index
    %c0_27 = arith.constant 0 : index
    %43 = vector.load %arg11[%c0_25, %c0_26, %c0_27] : memref<1x1x32xf32, #tpu.memory_space<vmem>>, vector<1x1x32xf32>
    %44 = vector.shape_cast %43 : vector<1x1x32xf32> to vector<1x32xf32>
    %45 = vector.broadcast %44 : vector<1x32xf32> to vector<8x32xf32>
    %46 = arith.addf %42, %45 : vector<8x32xf32>
    %c0_28 = arith.constant 0 : index
    %c0_29 = arith.constant 0 : index
    %c0_30 = arith.constant 0 : index
    %47 = vector.load %arg4[%c0_28, %c0_29, %c0_30] : memref<1x8x1xf32, #tpu.memory_space<vmem>>, vector<1x8x1xf32>
    %48 = vector.shape_cast %47 : vector<1x8x1xf32> to vector<8x1xf32>
    %cst_31 = arith.constant dense<0.000000e+00> : vector<1x32xf32>
    %49 = tpu.matmul %48, %46, %cst_31 {dimension_numbers = #tpu.dot_dimension_numbers<[0], [0], [1], [1], [0, 1, 1, 1], [], []>} : vector<8x1xf32>, vector<8x32xf32>, vector<1x32xf32> -> vector<1x32xf32>
    %c0_32 = arith.constant 0 : index
    %c0_33 = arith.constant 0 : index
    %50 = vector.load %arg28[%c0_32, %c0_33] : memref<1x32xf32, #tpu.memory_space<vmem>>, vector<1x32xf32>
    %51 = arith.addf %50, %49 : vector<1x32xf32>
    %c0_34 = arith.constant 0 : index
    %c0_35 = arith.constant 0 : index
    %52 = vector.load %arg28[%c0_34, %c0_35] : memref<1x32xf32, #tpu.memory_space<vmem>>, vector<1x32xf32>
    tpu.vector_store %arg28[%c0_34, %c0_35], %51 {strides = array<i32>} : memref<1x32xf32, #tpu.memory_space<vmem>>, vector<1x32xf32>,
    %c0_36 = arith.constant 0 : index
    %c0_37 = arith.constant 0 : index
    %53 = vector.load %arg29[%c0_36, %c0_37] : memref<1x1xf32, #tpu.memory_space<vmem>>, vector<1x1xf32>
    %54 = vector.shape_cast %48 : vector<8x1xf32> to vector<1x8x1xf32>
    %cst_38 = arith.constant dense<0.000000e+00> : vector<1xf32>
    %55 = vector.multi_reduction <add>, %54, %cst_38 [1, 2] : vector<1x8x1xf32> to vector<1xf32>
    %56 = vector.shape_cast %55 : vector<1xf32> to vector<1x1x1xf32>
    %57 = vector.extract %56[0, 0, 0] : f32 from vector<1x1x1xf32>
    %58 = vector.broadcast %57 : f32 to vector<1x1xf32>
    %59 = arith.addf %53, %58 : vector<1x1xf32>
    %c0_39 = arith.constant 0 : index
    %c0_40 = arith.constant 0 : index
    %60 = vector.load %arg29[%c0_39, %c0_40] : memref<1x1xf32, #tpu.memory_space<vmem>>, vector<1x1xf32>
    tpu.vector_store %arg29[%c0_39, %c0_40], %59 {strides = array<i32>} : memref<1x1xf32, #tpu.memory_space<vmem>>, vector<1x1xf32>,
    %c1_i32 = arith.constant 1 : i32
    %61 = arith.cmpi eq, %arg1, %c1_i32 : i32
    %62 = arith.extui %61 : i1 to i32
    %c0_i32_41 = arith.constant 0 : i32
    %63 = arith.cmpi ne, %62, %c0_i32_41 : i32
    scf.if %63 {
      %c0_42 = arith.constant 0 : index
      %c0_43 = arith.constant 0 : index
      %64 = vector.load %arg29[%c0_42, %c0_43] : memref<1x1xf32, #tpu.memory_space<vmem>>, vector<1x1xf32>
      %cst_44 = arith.constant 9.99999997E-7 : f32
      %65 = vector.broadcast %cst_44 : f32 to vector<1x1xf32>
      %66 = arith.maximumf %64, %65 : vector<1x1xf32>
      %c0_45 = arith.constant 0 : index
      %c0_46 = arith.constant 0 : index
      %67 = vector.load %arg28[%c0_45, %c0_46] : memref<1x32xf32, #tpu.memory_space<vmem>>, vector<1x32xf32>
      %68 = vector.broadcast %66 : vector<1x1xf32> to vector<1x32xf32>
      %69 = arith.divf %67, %68 : vector<1x32xf32>
      %c0_47 = arith.constant 0 : index
      %c0_48 = arith.constant 0 : index
      %c0_49 = arith.constant 0 : index
      %70 = vector.load %arg5[%c0_47, %c0_48, %c0_49] : memref<1x1x8xf32, #tpu.memory_space<vmem>>, vector<1x1x8xf32>
      %71 = vector.shape_cast %70 : vector<1x1x8xf32> to vector<1x8xf32>
      %c0_50 = arith.constant 0 : index
      %c0_51 = arith.constant 0 : index
      %72 = vector.load %arg12[%c0_50, %c0_51] : memref<32x32xf32, #tpu.memory_space<vmem>>, vector<32x32xf32>
      %cst_52 = arith.constant dense<0.000000e+00> : vector<1x32xf32>
      %73 = tpu.matmul %69, %72, %cst_52 {dimension_numbers = #tpu.dot_dimension_numbers<[1], [0], [0], [1], [0, 0, 1, 1], [], []>} : vector<1x32xf32>, vector<32x32xf32>, vector<1x32xf32> -> vector<1x32xf32>
      %c0_53 = arith.constant 0 : index
      %c0_54 = arith.constant 0 : index
      %74 = vector.load %arg13[%c0_53, %c0_54] : memref<8x32xf32, #tpu.memory_space<vmem>>, vector<8x32xf32>
      %cst_55 = arith.constant dense<0.000000e+00> : vector<1x32xf32>
      %75 = tpu.matmul %71, %74, %cst_55 {dimension_numbers = #tpu.dot_dimension_numbers<[1], [0], [0], [1], [0, 0, 1, 1], [], []>} : vector<1x8xf32>, vector<8x32xf32>, vector<1x32xf32> -> vector<1x32xf32>
      %76 = arith.addf %73, %75 : vector<1x32xf32>
      %c0_56 = arith.constant 0 : index
      %c0_57 = arith.constant 0 : index
      %77 = vector.load %arg14[%c0_56, %c0_57] : memref<1x32xf32, #tpu.memory_space<vmem>>, vector<1x32xf32>
      %78 = arith.addf %76, %77 : vector<1x32xf32>
      %c0_58 = arith.constant 0 : index
      %c0_59 = arith.constant 0 : index
      %79 = vector.load %arg15[%c0_58, %c0_59] : memref<1x32xf32, #tpu.memory_space<vmem>>, vector<1x32xf32>
      %c0_60 = arith.constant 0 : index
      %c0_61 = arith.constant 0 : index
      %80 = vector.load %arg16[%c0_60, %c0_61] : memref<1x32xf32, #tpu.memory_space<vmem>>, vector<1x32xf32>
      %cst_62 = arith.constant dense<0.000000e+00> : vector<1xf32>
      %81 = vector.multi_reduction <add>, %78, %cst_62 [1] : vector<1x32xf32> to vector<1xf32>
      %82 = vector.shape_cast %81 : vector<1xf32> to vector<1x1xf32>
      %cst_63 = arith.constant 3.200000e+01 : f32
      %83 = vector.broadcast %cst_63 : f32 to vector<1x1xf32>
      %84 = arith.divf %82, %83 : vector<1x1xf32>
      %85 = vector.broadcast %84 : vector<1x1xf32> to vector<1x32xf32>
      %86 = arith.subf %78, %85 : vector<1x32xf32>
      %87 = arith.mulf %86, %86 : vector<1x32xf32>
      %cst_64 = arith.constant dense<0.000000e+00> : vector<1xf32>
      %88 = vector.multi_reduction <add>, %87, %cst_64 [1] : vector<1x32xf32> to vector<1xf32>
      %89 = vector.shape_cast %88 : vector<1xf32> to vector<1x1xf32>
      %cst_65 = arith.constant 3.200000e+01 : f32
      %90 = vector.broadcast %cst_65 : f32 to vector<1x1xf32>
      %91 = arith.divf %89, %90 : vector<1x1xf32>
      %92 = vector.broadcast %84 : vector<1x1xf32> to vector<1x32xf32>
      %93 = arith.subf %78, %92 : vector<1x32xf32>
      %cst_66 = arith.constant 9.99999974E-6 : f32
      %94 = vector.broadcast %cst_66 : f32 to vector<1x1xf32>
      %95 = arith.addf %91, %94 : vector<1x1xf32>
      %96 = math.rsqrt %95 : vector<1x1xf32>
      %97 = vector.broadcast %96 : vector<1x1xf32> to vector<1x32xf32>
      %98 = arith.mulf %93, %97 : vector<1x32xf32>
      %99 = arith.mulf %98, %79 : vector<1x32xf32>
      %100 = arith.addf %99, %80 : vector<1x32xf32>
      %cst_67 = arith.constant 0.000000e+00 : f32
      %101 = vector.broadcast %cst_67 : f32 to vector<1x32xf32>
      %102 = arith.maximumf %100, %101 : vector<1x32xf32>
      %c0_68 = arith.constant 0 : index
      %c0_69 = arith.constant 0 : index
      %c0_70 = arith.constant 0 : index
      %103 = vector.load %arg25[%c0_68, %c0_69, %c0_70] : memref<1x1x32xf32, #tpu.memory_space<vmem>>, vector<1x1x32xf32>
      %104 = vector.shape_cast %103 : vector<1x1x32xf32> to vector<1x32xf32>
      %105 = vector.shape_cast %102 : vector<1x32xf32> to vector<1x1x32xf32>
      tpu.vector_store %arg25[%c0_68, %c0_69, %c0_70], %105 {strides = array<i32>} : memref<1x1x32xf32, #tpu.memory_space<vmem>>, vector<1x1x32xf32>,
      %c0_71 = arith.constant 0 : index
      %c0_72 = arith.constant 0 : index
      %106 = vector.load %arg17[%c0_71, %c0_72] : memref<32x32xf32, #tpu.memory_space<vmem>>, vector<32x32xf32>
      %cst_73 = arith.constant dense<0.000000e+00> : vector<1x32xf32>
      %107 = tpu.matmul %102, %106, %cst_73 {dimension_numbers = #tpu.dot_dimension_numbers<[1], [0], [0], [1], [0, 0, 1, 1], [], []>} : vector<1x32xf32>, vector<32x32xf32>, vector<1x32xf32> -> vector<1x32xf32>
      %c0_74 = arith.constant 0 : index
      %c0_75 = arith.constant 0 : index
      %108 = vector.load %arg18[%c0_74, %c0_75] : memref<1x32xf32, #tpu.memory_space<vmem>>, vector<1x32xf32>
      %109 = arith.addf %107, %108 : vector<1x32xf32>
      %c0_76 = arith.constant 0 : index
      %c0_77 = arith.constant 0 : index
      %110 = vector.load %arg19[%c0_76, %c0_77] : memref<1x32xf32, #tpu.memory_space<vmem>>, vector<1x32xf32>
      %c0_78 = arith.constant 0 : index
      %c0_79 = arith.constant 0 : index
      %111 = vector.load %arg20[%c0_78, %c0_79] : memref<1x32xf32, #tpu.memory_space<vmem>>, vector<1x32xf32>
      %cst_80 = arith.constant dense<0.000000e+00> : vector<1xf32>
      %112 = vector.multi_reduction <add>, %109, %cst_80 [1] : vector<1x32xf32> to vector<1xf32>
      %113 = vector.shape_cast %112 : vector<1xf32> to vector<1x1xf32>
      %cst_81 = arith.constant 3.200000e+01 : f32
      %114 = vector.broadcast %cst_81 : f32 to vector<1x1xf32>
      %115 = arith.divf %113, %114 : vector<1x1xf32>
      %116 = vector.broadcast %115 : vector<1x1xf32> to vector<1x32xf32>
      %117 = arith.subf %109, %116 : vector<1x32xf32>
      %118 = arith.mulf %117, %117 : vector<1x32xf32>
      %cst_82 = arith.constant dense<0.000000e+00> : vector<1xf32>
      %119 = vector.multi_reduction <add>, %118, %cst_82 [1] : vector<1x32xf32> to vector<1xf32>
      %120 = vector.shape_cast %119 : vector<1xf32> to vector<1x1xf32>
      %cst_83 = arith.constant 3.200000e+01 : f32
      %121 = vector.broadcast %cst_83 : f32 to vector<1x1xf32>
      %122 = arith.divf %120, %121 : vector<1x1xf32>
      %123 = vector.broadcast %115 : vector<1x1xf32> to vector<1x32xf32>
      %124 = arith.subf %109, %123 : vector<1x32xf32>
      %cst_84 = arith.constant 9.99999974E-6 : f32
      %125 = vector.broadcast %cst_84 : f32 to vector<1x1xf32>
      %126 = arith.addf %122, %125 : vector<1x1xf32>
      %127 = math.rsqrt %126 : vector<1x1xf32>
      %128 = vector.broadcast %127 : vector<1x1xf32> to vector<1x32xf32>
      %129 = arith.mulf %124, %128 : vector<1x32xf32>
      %130 = arith.mulf %129, %110 : vector<1x32xf32>
      %131 = arith.addf %130, %111 : vector<1x32xf32>
      %cst_85 = arith.constant 0.000000e+00 : f32
      %132 = vector.broadcast %cst_85 : f32 to vector<1x32xf32>
      %133 = arith.maximumf %131, %132 : vector<1x32xf32>
      %c0_86 = arith.constant 0 : index
      %c0_87 = arith.constant 0 : index
      %134 = vector.load %arg21[%c0_86, %c0_87] : memref<32x32xf32, #tpu.memory_space<vmem>>, vector<32x32xf32>
      %cst_88 = arith.constant dense<0.000000e+00> : vector<1x32xf32>
      %135 = tpu.matmul %133, %134, %cst_88 {dimension_numbers = #tpu.dot_dimension_numbers<[1], [0], [0], [1], [0, 0, 1, 1], [], []>} : vector<1x32xf32>, vector<32x32xf32>, vector<1x32xf32> -> vector<1x32xf32>
      %c0_89 = arith.constant 0 : index
      %c0_90 = arith.constant 0 : index
      %136 = vector.load %arg22[%c0_89, %c0_90] : memref<1x32xf32, #tpu.memory_space<vmem>>, vector<1x32xf32>
      %137 = arith.addf %135, %136 : vector<1x32xf32>
      %c0_91 = arith.constant 0 : index
      %c0_92 = arith.constant 0 : index
      %c0_93 = arith.constant 0 : index
      %138 = vector.load %arg26[%c0_91, %c0_92, %c0_93] : memref<1x1x32xf32, #tpu.memory_space<vmem>>, vector<1x1x32xf32>
      %139 = vector.shape_cast %138 : vector<1x1x32xf32> to vector<1x32xf32>
      %140 = vector.shape_cast %137 : vector<1x32xf32> to vector<1x1x32xf32>
      tpu.vector_store %arg26[%c0_91, %c0_92, %c0_93], %140 {strides = array<i32>} : memref<1x1x32xf32, #tpu.memory_space<vmem>>, vector<1x1x32xf32>,
      %c0_94 = arith.constant 0 : index
      %c0_95 = arith.constant 0 : index
      %141 = vector.load %arg23[%c0_94, %c0_95] : memref<32x8xf32, #tpu.memory_space<vmem>>, vector<32x8xf32>
      %cst_96 = arith.constant dense<0.000000e+00> : vector<1x8xf32>
      %142 = tpu.matmul %137, %141, %cst_96 {dimension_numbers = #tpu.dot_dimension_numbers<[1], [0], [0], [1], [0, 0, 1, 1], [], []>} : vector<1x32xf32>, vector<32x8xf32>, vector<1x8xf32> -> vector<1x8xf32>
      %c0_97 = arith.constant 0 : index
      %c0_98 = arith.constant 0 : index
      %143 = vector.load %arg24[%c0_97, %c0_98] : memref<1x8xf32, #tpu.memory_space<vmem>>, vector<1x8xf32>
      %144 = arith.addf %142, %143 : vector<1x8xf32>
      %c0_99 = arith.constant 0 : index
      %c0_100 = arith.constant 0 : index
      %c0_101 = arith.constant 0 : index
      %145 = vector.load %arg27[%c0_99, %c0_100, %c0_101] : memref<1x1x8xf32, #tpu.memory_space<vmem>>, vector<1x1x8xf32>
      %146 = vector.shape_cast %145 : vector<1x1x8xf32> to vector<1x8xf32>
      %147 = vector.shape_cast %144 : vector<1x8xf32> to vector<1x1x8xf32>
      tpu.vector_store %arg27[%c0_99, %c0_100, %c0_101], %147 {strides = array<i32>} : memref<1x1x8xf32, #tpu.memory_space<vmem>>, vector<1x1x8xf32>,
    } else {
    }
    return
  }
  func.func @transform_0(%arg0: i32, %arg1: i32, %arg2: memref<2xi32, #tpu.memory_space<smem>>) -> (i32, i32, i32) {
    %c0_i32 = arith.constant 0 : i32
    %c0_i32_0 = arith.constant 0 : i32
    return %arg0, %arg1, %c0_i32 : i32, i32, i32
  }
  func.func @transform_1(%arg0: i32, %arg1: i32, %arg2: memref<2xi32, #tpu.memory_space<smem>>) -> (i32, i32, i32) {
    %c0_i32 = arith.constant 0 : i32
    %c0_i32_0 = arith.constant 0 : i32
    return %arg0, %arg1, %c0_i32 : i32, i32, i32
  }
  func.func @transform_2(%arg0: i32, %arg1: i32, %arg2: memref<2xi32, #tpu.memory_space<smem>>) -> (i32, i32, i32) {
    %c0_i32 = arith.constant 0 : i32
    %c0_i32_0 = arith.constant 0 : i32
    %c0_i32_1 = arith.constant 0 : i32
    return %arg0, %c0_i32, %c0_i32_0 : i32, i32, i32
  }
  func.func @transform_3(%arg0: i32, %arg1: i32, %arg2: memref<2xi32, #tpu.memory_space<smem>>) -> (i32, i32, i32) {
    %0 = arith.index_cast %arg0 : i32 to index
    %1 = memref.load %arg2[%0] : memref<2xi32, #tpu.memory_space<smem>>
    %c0_i32 = arith.constant 0 : i32
    %c0_i32_0 = arith.constant 0 : i32
    %c0_i32_1 = arith.constant 0 : i32
    return %1, %c0_i32, %c0_i32_0 : i32, i32, i32
  }
  func.func @transform_4(%arg0: i32, %arg1: i32, %arg2: memref<2xi32, #tpu.memory_space<smem>>) -> (i32, i32, i32) {
    %0 = arith.index_cast %arg0 : i32 to index
    %1 = memref.load %arg2[%0] : memref<2xi32, #tpu.memory_space<smem>>
    %c0_i32 = arith.constant 0 : i32
    %c0_i32_0 = arith.constant 0 : i32
    %c0_i32_1 = arith.constant 0 : i32
    return %1, %c0_i32, %c0_i32_0 : i32, i32, i32
  }
  func.func @transform_5(%arg0: i32, %arg1: i32, %arg2: memref<2xi32, #tpu.memory_space<smem>>) -> (i32, i32, i32) {
    %0 = arith.index_cast %arg0 : i32 to index
    %1 = memref.load %arg2[%0] : memref<2xi32, #tpu.memory_space<smem>>
    %c0_i32 = arith.constant 0 : i32
    %c0_i32_0 = arith.constant 0 : i32
    %c0_i32_1 = arith.constant 0 : i32
    return %1, %c0_i32, %c0_i32_0 : i32, i32, i32
  }
  func.func @transform_6(%arg0: i32, %arg1: i32, %arg2: memref<2xi32, #tpu.memory_space<smem>>) -> (i32, i32, i32) {
    %0 = arith.index_cast %arg0 : i32 to index
    %1 = memref.load %arg2[%0] : memref<2xi32, #tpu.memory_space<smem>>
    %c0_i32 = arith.constant 0 : i32
    %c0_i32_0 = arith.constant 0 : i32
    %c0_i32_1 = arith.constant 0 : i32
    return %1, %c0_i32, %c0_i32_0 : i32, i32, i32
  }
  func.func @transform_7(%arg0: i32, %arg1: i32, %arg2: memref<2xi32, #tpu.memory_space<smem>>) -> (i32, i32, i32) {
    %0 = arith.index_cast %arg0 : i32 to index
    %1 = memref.load %arg2[%0] : memref<2xi32, #tpu.memory_space<smem>>
    %c0_i32 = arith.constant 0 : i32
    %c0_i32_0 = arith.constant 0 : i32
    %c0_i32_1 = arith.constant 0 : i32
    return %1, %c0_i32, %c0_i32_0 : i32, i32, i32
  }
  func.func @transform_8(%arg0: i32, %arg1: i32, %arg2: memref<2xi32, #tpu.memory_space<smem>>) -> (i32, i32, i32) {
    %0 = arith.index_cast %arg0 : i32 to index
    %1 = memref.load %arg2[%0] : memref<2xi32, #tpu.memory_space<smem>>
    %c0_i32 = arith.constant 0 : i32
    %c0_i32_0 = arith.constant 0 : i32
    %c0_i32_1 = arith.constant 0 : i32
    return %1, %c0_i32, %c0_i32_0 : i32, i32, i32
  }
  func.func @transform_9(%arg0: i32, %arg1: i32, %arg2: memref<2xi32, #tpu.memory_space<smem>>) -> (i32, i32) {
    %c0_i32 = arith.constant 0 : i32
    %c0_i32_0 = arith.constant 0 : i32
    %c0_i32_1 = arith.constant 0 : i32
    return %c0_i32, %c0_i32_0 : i32, i32
  }
  func.func @transform_10(%arg0: i32, %arg1: i32, %arg2: memref<2xi32, #tpu.memory_space<smem>>) -> (i32, i32) {
    %c0_i32 = arith.constant 0 : i32
    %c0_i32_0 = arith.constant 0 : i32
    %c0_i32_1 = arith.constant 0 : i32
    return %c0_i32, %c0_i32_0 : i32, i32
  }
  func.func @transform_11(%arg0: i32, %arg1: i32, %arg2: memref<2xi32, #tpu.memory_space<smem>>) -> (i32, i32) {
    %c0_i32 = arith.constant 0 : i32
    %c0_i32_0 = arith.constant 0 : i32
    %c0_i32_1 = arith.constant 0 : i32
    return %c0_i32, %c0_i32_0 : i32, i32
  }
  func.func @transform_12(%arg0: i32, %arg1: i32, %arg2: memref<2xi32, #tpu.memory_space<smem>>) -> (i32, i32) {
    %c0_i32 = arith.constant 0 : i32
    %c0_i32_0 = arith.constant 0 : i32
    %c0_i32_1 = arith.constant 0 : i32
    return %c0_i32, %c0_i32_0 : i32, i32
  }
  func.func @transform_13(%arg0: i32, %arg1: i32, %arg2: memref<2xi32, #tpu.memory_space<smem>>) -> (i32, i32) {
    %c0_i32 = arith.constant 0 : i32
    %c0_i32_0 = arith.constant 0 : i32
    %c0_i32_1 = arith.constant 0 : i32
    return %c0_i32, %c0_i32_0 : i32, i32
  }
  func.func @transform_14(%arg0: i32, %arg1: i32, %arg2: memref<2xi32, #tpu.memory_space<smem>>) -> (i32, i32) {
    %c0_i32 = arith.constant 0 : i32
    %c0_i32_0 = arith.constant 0 : i32
    %c0_i32_1 = arith.constant 0 : i32
    return %c0_i32, %c0_i32_0 : i32, i32
  }
  func.func @transform_15(%arg0: i32, %arg1: i32, %arg2: memref<2xi32, #tpu.memory_space<smem>>) -> (i32, i32) {
    %c0_i32 = arith.constant 0 : i32
    %c0_i32_0 = arith.constant 0 : i32
    %c0_i32_1 = arith.constant 0 : i32
    return %c0_i32, %c0_i32_0 : i32, i32
  }
  func.func @transform_16(%arg0: i32, %arg1: i32, %arg2: memref<2xi32, #tpu.memory_space<smem>>) -> (i32, i32) {
    %c0_i32 = arith.constant 0 : i32
    %c0_i32_0 = arith.constant 0 : i32
    %c0_i32_1 = arith.constant 0 : i32
    return %c0_i32, %c0_i32_0 : i32, i32
  }
  func.func @transform_17(%arg0: i32, %arg1: i32, %arg2: memref<2xi32, #tpu.memory_space<smem>>) -> (i32, i32) {
    %c0_i32 = arith.constant 0 : i32
    %c0_i32_0 = arith.constant 0 : i32
    %c0_i32_1 = arith.constant 0 : i32
    return %c0_i32, %c0_i32_0 : i32, i32
  }
  func.func @transform_18(%arg0: i32, %arg1: i32, %arg2: memref<2xi32, #tpu.memory_space<smem>>) -> (i32, i32) {
    %c0_i32 = arith.constant 0 : i32
    %c0_i32_0 = arith.constant 0 : i32
    %c0_i32_1 = arith.constant 0 : i32
    return %c0_i32, %c0_i32_0 : i32, i32
  }
  func.func @transform_19(%arg0: i32, %arg1: i32, %arg2: memref<2xi32, #tpu.memory_space<smem>>) -> (i32, i32) {
    %c0_i32 = arith.constant 0 : i32
    %c0_i32_0 = arith.constant 0 : i32
    %c0_i32_1 = arith.constant 0 : i32
    return %c0_i32, %c0_i32_0 : i32, i32
  }
  func.func @transform_20(%arg0: i32, %arg1: i32, %arg2: memref<2xi32, #tpu.memory_space<smem>>) -> (i32, i32) {
    %c0_i32 = arith.constant 0 : i32
    %c0_i32_0 = arith.constant 0 : i32
    %c0_i32_1 = arith.constant 0 : i32
    return %c0_i32, %c0_i32_0 : i32, i32
  }
  func.func @transform_21(%arg0: i32, %arg1: i32, %arg2: memref<2xi32, #tpu.memory_space<smem>>) -> (i32, i32) {
    %c0_i32 = arith.constant 0 : i32
    %c0_i32_0 = arith.constant 0 : i32
    %c0_i32_1 = arith.constant 0 : i32
    return %c0_i32, %c0_i32_0 : i32, i32
  }
  func.func @transform_22(%arg0: i32, %arg1: i32, %arg2: memref<2xi32, #tpu.memory_space<smem>>) -> (i32, i32, i32) {
    %c0_i32 = arith.constant 0 : i32
    %c0_i32_0 = arith.constant 0 : i32
    %c0_i32_1 = arith.constant 0 : i32
    return %arg0, %c0_i32, %c0_i32_0 : i32, i32, i32
  }
  func.func @transform_23(%arg0: i32, %arg1: i32, %arg2: memref<2xi32, #tpu.memory_space<smem>>) -> (i32, i32, i32) {
    %c0_i32 = arith.constant 0 : i32
    %c0_i32_0 = arith.constant 0 : i32
    %c0_i32_1 = arith.constant 0 : i32
    return %arg0, %c0_i32, %c0_i32_0 : i32, i32, i32
  }
  func.func @transform_24(%arg0: i32, %arg1: i32, %arg2: memref<2xi32, #tpu.memory_space<smem>>) -> (i32, i32, i32) {
    %c0_i32 = arith.constant 0 : i32
    %c0_i32_0 = arith.constant 0 : i32
    %c0_i32_1 = arith.constant 0 : i32
    return %arg0, %c0_i32, %c0_i32_0 : i32, i32, i32
  }
}

</mosaic_0001>

<llo_original>
// kernel: tpu_custom_call.1
$region0: #{tpu_custom_call.1}
  #allocation0 [shape = 'u32[]', space=smem, size = 0x4, offset = 0x4, fixed_abs, tag = 'smem constant byte address 0x4 - core index']
  #allocation1 [shape = 'u32[144,128]{1,0:T(1,128)}', space=vmem, size = 0x12000, scoped, tag = 'internal scratch']
  #allocation2 [shape = 'f32[1,32]{1,0:T(1,128)}', space=vmem, size = 0x200, scoped, tag = 'scratch operand']
  #allocation3 [shape = 'f32[1,1]{1,0:T(1,128)}', space=vmem, size = 0x200, scoped, tag = 'scratch operand']
  #allocation4 [shape = 's32[1]{0}', space=sflag, size = 0x4, scoped, tag = 'scoped memory for tpu_custom_call.1']
  #allocation5 [shape = 'u8[512]{0}', space=smem, size = 0x200, scoped, tag = 'prefetched SMEM operand 0']
  %s0 = inlined_call_operand.hbm [shape: s32[2], index: 0, kind: input, shape index: {}]
  %s1 = inlined_call_operand.hbm [shape: f32[2,16,32], index: 1, kind: input, shape index: {}]
  %s2 = inlined_call_operand.hbm [shape: f32[2,16,1], index: 2, kind: input, shape index: {}]
  %s3 = inlined_call_operand.hbm [shape: f32[2,1,8], index: 3, kind: input, shape index: {}]
  %s4 = inlined_call_operand.hbm [shape: f32[5,32,32], index: 4, kind: input, shape index: {}]
  %s5 = inlined_call_operand.hbm [shape: f32[5,1,32], index: 5, kind: input, shape index: {}]
  %s6 = inlined_call_operand.hbm [shape: f32[5,1,32], index: 6, kind: input, shape index: {}]
  %s7 = inlined_call_operand.hbm [shape: f32[5,1,32], index: 7, kind: input, shape index: {}]
  %s8 = inlined_call_operand.hbm [shape: f32[5,32,32], index: 8, kind: input, shape index: {}]
  %s9 = inlined_call_operand.hbm [shape: f32[5,1,32], index: 9, kind: input, shape index: {}]
  %s10 = inlined_call_operand.hbm [shape: f32[32,32], index: 10, kind: input, shape index: {}]
  %s11 = inlined_call_operand.hbm [shape: f32[8,32], index: 11, kind: input, shape index: {}]
  %s12 = inlined_call_operand.hbm [shape: f32[1,32], index: 12, kind: input, shape index: {}]
  %s13 = inlined_call_operand.hbm [shape: f32[1,32], index: 13, kind: input, shape index: {}]
  %s14 = inlined_call_operand.hbm [shape: f32[1,32], index: 14, kind: input, shape index: {}]
  %s15 = inlined_call_operand.hbm [shape: f32[32,32], index: 15, kind: input, shape index: {}]
  %s16 = inlined_call_operand.hbm [shape: f32[1,32], index: 16, kind: input, shape index: {}]
  %s17 = inlined_call_operand.hbm [shape: f32[1,32], index: 17, kind: input, shape index: {}]
  %s18 = inlined_call_operand.hbm [shape: f32[1,32], index: 18, kind: input, shape index: {}]
  %s19 = inlined_call_operand.hbm [shape: f32[32,32], index: 19, kind: input, shape index: {}]
  %s20 = inlined_call_operand.hbm [shape: f32[1,32], index: 20, kind: input, shape index: {}]
  %s21 = inlined_call_operand.hbm [shape: f32[32,8], index: 21, kind: input, shape index: {}]
  %s22 = inlined_call_operand.hbm [shape: f32[1,8], index: 22, kind: input, shape index: {}]
  %s23 = inlined_call_operand.hbm [shape: f32[2,1,32], index: 23, kind: output, shape index: {0}]
  %s24 = inlined_call_operand.hbm [shape: f32[2,1,32], index: 24, kind: output, shape index: {1}]
  %s25 = inlined_call_operand.hbm [shape: f32[2,1,8], index: 25, kind: output, shape index: {2}]
  %26 = xla_tuple %s23, %s24, %s25
  %s27 = sld [smem:[#allocation0]]
  $region233: #{tpu_custom_call.1} parent=0
    _
  %s29 = ssub.s32 1, %s27
  %s30 = scalar_select 0, %s29, %s27
  %32 = dma.hbm_to_smem %s0, 16, [#allocation5], [#allocation4]
  %33 = dma.done [#allocation4], 16
  %34 = sfence
  $region1: #{tpu_custom_call.1} parent=0
    #allocation6 [shape = 'u8[8192]{0}', space=vmem, size = 0x2000, scoped, tag = 'input window, operand 1']
    #allocation7 [shape = 's32[2]{0}', space=sflag, size = 0x8, scoped, tag = 'scoped memory for tpu_custom_call.1']
    #allocation8 [shape = 's32[2]{0}', space=sflag, size = 0x8, scoped, tag = 'scoped memory for tpu_custom_call.1']
    #allocation9 [shape = 'u8[8192]{0}', space=vmem, size = 0x2000, scoped, tag = 'input window, operand 2']
    #allocation10 [shape = 's32[2]{0}', space=sflag, size = 0x8, scoped, tag = 'scoped memory for tpu_custom_call.1']
    #allocation11 [shape = 'u8[1024]{0}', space=vmem, size = 0x400, scoped, tag = 'input window, operand 3']
    #allocation12 [shape = 'u8[32768]{0}', space=vmem, size = 0x8000, scoped, tag = 'input window, operand 4']
    #allocation13 [shape = 's32[2]{0}', space=sflag, size = 0x8, scoped, tag = 'scoped memory for tpu_custom_call.1']
    #allocation14 [shape = 'u8[1024]{0}', space=vmem, size = 0x400, scoped, tag = 'input window, operand 5']
    #allocation15 [shape = 'u8[1024]{0}', space=vmem, size = 0x400, scoped, tag = 'input window, operand 6']
    #allocation16 [shape = 's32[2]{0}', space=sflag, size = 0x8, scoped, tag = 'scoped memory for tpu_custom_call.1']
    #allocation17 [shape = 'u8[1024]{0}', space=vmem, size = 0x400, scoped, tag = 'input window, operand 7']
    #allocation18 [shape = 'u8[32768]{0}', space=vmem, size = 0x8000, scoped, tag = 'input window, operand 8']
    #allocation19 [shape = 's32[2]{0}', space=sflag, size = 0x8, scoped, tag = 'scoped memory for tpu_custom_call.1']
    #allocation20 [shape = 'u8[1024]{0}', space=vmem, size = 0x400, scoped, tag = 'input window, operand 9']
    #allocation21 [shape = 'u8[16384]{0}', space=vmem, size = 0x4000, scoped, tag = 'input window, operand 10, single buffered']
    #allocation22 [shape = 's32[1]{0}', space=sflag, size = 0x4, scoped, tag = 'scoped memory for tpu_custom_call.1']
    #allocation23 [shape = 'u8[4096]{0}', space=vmem, size = 0x1000, scoped, tag = 'input window, operand 11, single buffered']
    #allocation24 [shape = 'u8[512]{0}', space=vmem, size = 0x400, scoped, tag = 'input window, operand 12, single buffered']
    #allocation25 [shape = 's32[1]{0}', space=sflag, size = 0x4, scoped, tag = 'scoped memory for tpu_custom_call.1']
    #allocation26 [shape = 'u8[512]{0}', space=vmem, size = 0x400, scoped, tag = 'input window, operand 13, single buffered']
    #allocation27 [shape = 'u8[512]{0}', space=vmem, size = 0x400, scoped, tag = 'input window, operand 14, single buffered']
    #allocation28 [shape = 's32[1]{0}', space=sflag, size = 0x4, scoped, tag = 'scoped memory for tpu_custom_call.1']
    #allocation29 [shape = 'u8[16384]{0}', space=vmem, size = 0x4000, scoped, tag = 'input window, operand 15, single buffered']
    #allocation30 [shape = 'u8[512]{0}', space=vmem, size = 0x400, scoped, tag = 'input window, operand 16, single buffered']
    #allocation31 [shape = 's32[1]{0}', space=sflag, size = 0x4, scoped, tag = 'scoped memory for tpu_custom_call.1']
    #allocation32 [shape = 'u8[512]{0}', space=vmem, size = 0x400, scoped, tag = 'input window, operand 17, single buffered']
    #allocation33 [shape = 'u8[512]{0}', space=vmem, size = 0x400, scoped, tag = 'input window, operand 18, single buffered']
    #allocation34 [shape = 's32[1]{0}', space=sflag, size = 0x4, scoped, tag = 'scoped memory for tpu_custom_call.1']
    #allocation35 [shape = 'u8[16384]{0}', space=vmem, size = 0x4000, scoped, tag = 'input window, operand 19, single buffered']
    #allocation36 [shape = 'u8[512]{0}', space=vmem, size = 0x400, scoped, tag = 'input window, operand 20, single buffered']
    #allocation37 [shape = 's32[1]{0}', space=sflag, size = 0x4, scoped, tag = 'scoped memory for tpu_custom_call.1']
    #allocation38 [shape = 'u8[16384]{0}', space=vmem, size = 0x4000, scoped, tag = 'input window, operand 21, single buffered']
    #allocation39 [shape = 'u8[512]{0}', space=vmem, size = 0x400, scoped, tag = 'input window, operand 22, single buffered']
    #allocation40 [shape = 's32[1]{0}', space=sflag, size = 0x4, scoped, tag = 'scoped memory for tpu_custom_call.1']
    #allocation41 [shape = 'u8[1024]{0}', space=vmem, size = 0x400, scoped, tag = 'output window, operand 0']
    #allocation42 [shape = 'u8[1024]{0}', space=vmem, size = 0x400, scoped, tag = 'output window, operand 1']
    #allocation43 [shape = 's32[2]{0}', space=sflag, size = 0x8, scoped, tag = 'scoped memory for tpu_custom_call.1']
    #allocation44 [shape = 'u8[1024]{0}', space=vmem, size = 0x400, scoped, tag = 'output window, operand 2']
    %35 = vsyncpa [#allocation7], 0
    %s36 = scalar_lea.sflag [#allocation7], 1
    %37 = vsyncpa %s36, 0
    %38 = vsyncpa [#allocation10], 0
    %s39 = scalar_lea.sflag [#allocation10], 1
    %40 = vsyncpa %s39, 0
    %41 = vsyncpa [#allocation13], 0
    %s42 = scalar_lea.sflag [#allocation13], 1
    %43 = vsyncpa %s42, 0
    %44 = vsyncpa [#allocation16], 0
    %s45 = scalar_lea.sflag [#allocation16], 1
    %46 = vsyncpa %s45, 0
    %47 = vsyncpa [#allocation19], 0
    %s48 = scalar_lea.sflag [#allocation19], 1
    %49 = vsyncpa %s48, 0
    %50 = vsyncpa [#allocation22], 0
    %51 = vsyncpa [#allocation25], 0
    %52 = vsyncpa [#allocation28], 0
    %53 = vsyncpa [#allocation31], 0
    %54 = vsyncpa [#allocation34], 0
    %55 = vsyncpa [#allocation37], 0
    %56 = vsyncpa [#allocation40], 0
    %57 = vsyncpa [#allocation8], 0
    %s58 = scalar_lea.sflag [#allocation8], 1
    %59 = vsyncpa %s58, 0
    %60 = vsyncpa [#allocation43], 0
    %s61 = scalar_lea.sflag [#allocation43], 1
    %62 = vsyncpa %s61, 0
    loop: start=0, step=1, limit=6
    $region2: #{tpu_custom_call.1} parent=1 // loop_pre_header
      _
    $region3: #{tpu_custom_call.1} parent=1 // loop_header
      %s64 = sphi 0, %s68
      %p65 = scmp.ge.s32.totalorder %s64, 6
      %s71 = sphi 0, %s83
      %s72 = sphi 0, %s79
      %s73 = sphi 0, %s71
      %s74 = sphi 0, %s72
      %s75 = sphi 0, %s73
      %s76 = sphi 0, %s74
      %s88 = sphi 0, %s90
      %s91 = sphi 0, %s88
      %s92 = sphi 0, %s91
      %s108 = sphi 0, %s92
      %s116 = sphi 0, %s118
      %s119 = sphi 0, %s116
      %s120 = sphi 0, %s119
      %s136 = sphi 0, %s120
      %s142 = sphi 0, %s144
      %s145 = sphi 0, %s142
      %s146 = sphi 0, %s145
      %s162 = sphi 0, %s146
      %s170 = sphi 0, %s172
      %s173 = sphi 0, %s170
      %s174 = sphi 0, %s173
      %s190 = sphi 0, %s174
      %s198 = sphi 0, %s200
      %s201 = sphi 0, %s198
      %s202 = sphi 0, %s201
      %s218 = sphi 0, %s202
      %s226 = sphi 0, %s228
      %s229 = sphi 0, %s226
      %s230 = sphi 0, %s229
      %s246 = sphi 0, %s230
      %s254 = sphi 0, %s256
      %s257 = sphi 0, %s254
      %s258 = sphi 0, %s257
      %s274 = sphi 0, %s258
      %s282 = sphi 0, %s284
      %s285 = sphi 0, %s282
      %s286 = sphi 0, %s285
      %s302 = sphi 0, %s286
      %s310 = sphi 0, %s312
      %s313 = sphi 0, %s310
      %s314 = sphi 0, %s313
      %s330 = sphi 0, %s314
      %s334 = sphi 0, %s334
      %s336 = sphi 0, %s334
      %s337 = sphi 0, %s336
      %s351 = sphi 0, %s337
      %s355 = sphi 0, %s355
      %s357 = sphi 0, %s355
      %s358 = sphi 0, %s357
      %s372 = sphi 0, %s358
      %s376 = sphi 0, %s376
      %s378 = sphi 0, %s376
      %s379 = sphi 0, %s378
      %s393 = sphi 0, %s379
      %s397 = sphi 0, %s397
      %s399 = sphi 0, %s397
      %s400 = sphi 0, %s399
      %s414 = sphi 0, %s400
      %s418 = sphi 0, %s418
      %s420 = sphi 0, %s418
      %s421 = sphi 0, %s420
      %s435 = sphi 0, %s421
      %s439 = sphi 0, %s439
      %s441 = sphi 0, %s439
      %s442 = sphi 0, %s441
      %s456 = sphi 0, %s442
      %s460 = sphi 0, %s460
      %s462 = sphi 0, %s460
      %s463 = sphi 0, %s462
      %s477 = sphi 0, %s463
      %s481 = sphi 0, %s481
      %s483 = sphi 0, %s481
      %s484 = sphi 0, %s483
      %s498 = sphi 0, %s484
      %s502 = sphi 0, %s502
      %s504 = sphi 0, %s502
      %s505 = sphi 0, %s504
      %s519 = sphi 0, %s505
      %s523 = sphi 0, %s523
      %s525 = sphi 0, %s523
      %s526 = sphi 0, %s525
      %s540 = sphi 0, %s526
      %s544 = sphi 0, %s544
      %s546 = sphi 0, %s544
      %s547 = sphi 0, %s546
      %s561 = sphi 0, %s547
      %s565 = sphi 0, %s565
      %s567 = sphi 0, %s565
      %s568 = sphi 0, %s567
      %s582 = sphi 0, %s568
      %s586 = sphi 0, %s586
      %s588 = sphi 0, %s586
      %s589 = sphi 0, %s588
      %s603 = sphi 0, %s589
      %s609 = sphi 0, %s611
      %s612 = sphi 0, %s609
      %s613 = sphi 0, %s612
      %s629 = sphi 0, %s613
      %s635 = sphi 0, %s637
      %s638 = sphi 0, %s635
      %s639 = sphi 0, %s638
      %s655 = sphi 0, %s639
      %s661 = sphi 0, %s663
      %s664 = sphi 0, %s661
      %s665 = sphi 0, %s664
      %s681 = sphi 0, %s665
    $region4: #{tpu_custom_call.1} parent=1 // loop_header_branch
      %67 = sbr.rel (%p65) target = $region8
    $region5: #{tpu_custom_call.1} parent=1 // loop_body
      %s69 = ssub.s32 %s64, 1
      %s70 = ssub.s32 %s64, 2
      %s77 = sadd.s32 1, %s72
      %p78 = scmp.ge.s32.totalorder %s77, 2
      %s79 = scalar_select %p78, 0, %s77
      %s80 = sadd.s32 1, %s71
      %s81 = scalar_select %p78, %s80, %s71
      %p82 = scmp.ge.s32.totalorder %s81, 2
      %s83 = scalar_select %p82, 0, %s81
      %s84 = ssub.s32 %s71, %s83
      %s85 = ssub.s32 %s72, %s79
      %s86 = sor.u32 %s84, %s85
      %p87 = scmp.eq.s32.totalorder %s86, 0
      %s89 = sadd.s32 %s88, 1
      %s90 = scalar_select %p87, %s88, %s89
      %p93 = pneg %p87
      %p94 = scmp.eq.s32.totalorder %s64, 3
      %p95 = por %p93, %p94
      %p96 = scmp.ne.s32.totalorder %s88, %s91
      %p97 = scmp.eq.s32.totalorder %s64, 0
      %p98 = por %p96, %p97
      %p99 = scmp.ne.s32.totalorder %s88, %s91
      %p100 = scmp.eq.s32.totalorder %s69, 3
      %p101 = por %p99, %p100
      %p102 = scmp.ne.s32.totalorder %s91, %s92
      %p103 = scmp.eq.s32.totalorder %s69, 0
      %p104 = por %p102, %p103
      %p105 = scmp.ne.s32.totalorder %s91, %s92
      %p106 = scmp.eq.s32.totalorder %s70, 3
      %p107 = por %p105, %p106
      %p109 = scmp.ne.s32.totalorder %s92, %s108
      %p110 = scmp.eq.s32.totalorder %s70, 0
      %p111 = por %p109, %p110
      %s112 = ssub.s32 %s71, %s83
      %s113 = ssub.s32 %s72, %s79
      %s114 = sor.u32 %s112, %s113
      %p115 = scmp.eq.s32.totalorder %s114, 0
      %s117 = sadd.s32 %s116, 1
      %s118 = scalar_select %p115, %s116, %s117
      %p121 = pneg %p115
      %p122 = scmp.eq.s32.totalorder %s64, 3
      %p123 = por %p121, %p122
      %p124 = scmp.ne.s32.totalorder %s116, %s119
      %p125 = scmp.eq.s32.totalorder %s64, 0
      %p126 = por %p124, %p125
      %p127 = scmp.ne.s32.totalorder %s116, %s119
      %p128 = scmp.eq.s32.totalorder %s69, 3
      %p129 = por %p127, %p128
      %p130 = scmp.ne.s32.totalorder %s119, %s120
      %p131 = scmp.eq.s32.totalorder %s69, 0
      %p132 = por %p130, %p131
      %p133 = scmp.ne.s32.totalorder %s119, %s120
      %p134 = scmp.eq.s32.totalorder %s70, 3
      %p135 = por %p133, %p134
      %p137 = scmp.ne.s32.totalorder %s120, %s136
      %p138 = scmp.eq.s32.totalorder %s70, 0
      %p139 = por %p137, %p138
      %s140 = ssub.s32 %s71, %s83
      %p141 = scmp.eq.s32.totalorder %s140, 0
      %s143 = sadd.s32 %s142, 1
      %s144 = scalar_select %p141, %s142, %s143
      %p147 = pneg %p141
      %p148 = scmp.eq.s32.totalorder %s64, 3
      %p149 = por %p147, %p148
      %p150 = scmp.ne.s32.totalorder %s142, %s145
      %p151 = scmp.eq.s32.totalorder %s64, 0
      %p152 = por %p150, %p151
      %p153 = scmp.ne.s32.totalorder %s142, %s145
      %p154 = scmp.eq.s32.totalorder %s69, 3
      %p155 = por %p153, %p154
      %p156 = scmp.ne.s32.totalorder %s145, %s146
      %p157 = scmp.eq.s32.totalorder %s69, 0
      %p158 = por %p156, %p157
      %p159 = scmp.ne.s32.totalorder %s145, %s146
      %p160 = scmp.eq.s32.totalorder %s70, 3
      %p161 = por %p159, %p160
      %p163 = scmp.ne.s32.totalorder %s146, %s162
      %p164 = scmp.eq.s32.totalorder %s70, 0
      %p165 = por %p163, %p164
      %s166 = sld [smem:[#allocation5 + %s71]]
      %s167 = sld [smem:[#allocation5 + %s83]]
      %s168 = ssub.s32 %s166, %s167
      %p169 = scmp.eq.s32.totalorder %s168, 0
      %s171 = sadd.s32 %s170, 1
      %s172 = scalar_select %p169, %s170, %s171
      %p175 = pneg %p169
      %p176 = scmp.eq.s32.totalorder %s64, 3
      %p177 = por %p175, %p176
      %p178 = scmp.ne.s32.totalorder %s170, %s173
      %p179 = scmp.eq.s32.totalorder %s64, 0
      %p180 = por %p178, %p179
      %p181 = scmp.ne.s32.totalorder %s170, %s173
      %p182 = scmp.eq.s32.totalorder %s69, 3
      %p183 = por %p181, %p182
      %p184 = scmp.ne.s32.totalorder %s173, %s174
      %p185 = scmp.eq.s32.totalorder %s69, 0
      %p186 = por %p184, %p185
      %p187 = scmp.ne.s32.totalorder %s173, %s174
      %p188 = scmp.eq.s32.totalorder %s70, 3
      %p189 = por %p187, %p188
      %p191 = scmp.ne.s32.totalorder %s174, %s190
      %p192 = scmp.eq.s32.totalorder %s70, 0
      %p193 = por %p191, %p192
      %s194 = sld [smem:[#allocation5 + %s71]]
      %s195 = sld [smem:[#allocation5 + %s83]]
      %s196 = ssub.s32 %s194, %s195
      %p197 = scmp.eq.s32.totalorder %s196, 0
      %s199 = sadd.s32 %s198, 1
      %s200 = scalar_select %p197, %s198, %s199
      %p203 = pneg %p197
      %p204 = scmp.eq.s32.totalorder %s64, 3
      %p205 = por %p203, %p204
      %p206 = scmp.ne.s32.totalorder %s198, %s201
      %p207 = scmp.eq.s32.totalorder %s64, 0
      %p208 = por %p206, %p207
      %p209 = scmp.ne.s32.totalorder %s198, %s201
      %p210 = scmp.eq.s32.totalorder %s69, 3
      %p211 = por %p209, %p210
      %p212 = scmp.ne.s32.totalorder %s201, %s202
      %p213 = scmp.eq.s32.totalorder %s69, 0
      %p214 = por %p212, %p213
      %p215 = scmp.ne.s32.totalorder %s201, %s202
      %p216 = scmp.eq.s32.totalorder %s70, 3
      %p217 = por %p215, %p216
      %p219 = scmp.ne.s32.totalorder %s202, %s218
      %p220 = scmp.eq.s32.totalorder %s70, 0
      %p221 = por %p219, %p220
      %s222 = sld [smem:[#allocation5 + %s71]]
      %s223 = sld [smem:[#allocation5 + %s83]]
      %s224 = ssub.s32 %s222, %s223
      %p225 = scmp.eq.s32.totalorder %s224, 0
      %s227 = sadd.s32 %s226, 1
      %s228 = scalar_select %p225, %s226, %s227
      %p231 = pneg %p225
      %p232 = scmp.eq.s32.totalorder %s64, 3
      %p233 = por %p231, %p232
      %p234 = scmp.ne.s32.totalorder %s226, %s229
      %p235 = scmp.eq.s32.totalorder %s64, 0
      %p236 = por %p234, %p235
      %p237 = scmp.ne.s32.totalorder %s226, %s229
      %p238 = scmp.eq.s32.totalorder %s69, 3
      %p239 = por %p237, %p238
      %p240 = scmp.ne.s32.totalorder %s229, %s230
      %p241 = scmp.eq.s32.totalorder %s69, 0
      %p242 = por %p240, %p241
      %p243 = scmp.ne.s32.totalorder %s229, %s230
      %p244 = scmp.eq.s32.totalorder %s70, 3
      %p245 = por %p243, %p244
      %p247 = scmp.ne.s32.totalorder %s230, %s246
      %p248 = scmp.eq.s32.totalorder %s70, 0
      %p249 = por %p247, %p248
      %s250 = sld [smem:[#allocation5 + %s71]]
      %s251 = sld [smem:[#allocation5 + %s83]]
      %s252 = ssub.s32 %s250, %s251
      %p253 = scmp.eq.s32.totalorder %s252, 0
      %s255 = sadd.s32 %s254, 1
      %s256 = scalar_select %p253, %s254, %s255
      %p259 = pneg %p253
      %p260 = scmp.eq.s32.totalorder %s64, 3
      %p261 = por %p259, %p260
      %p262 = scmp.ne.s32.totalorder %s254, %s257
      %p263 = scmp.eq.s32.totalorder %s64, 0
      %p264 = por %p262, %p263
      %p265 = scmp.ne.s32.totalorder %s254, %s257
      %p266 = scmp.eq.s32.totalorder %s69, 3
      %p267 = por %p265, %p266
      %p268 = scmp.ne.s32.totalorder %s257, %s258
      %p269 = scmp.eq.s32.totalorder %s69, 0
      %p270 = por %p268, %p269
      %p271 = scmp.ne.s32.totalorder %s257, %s258
      %p272 = scmp.eq.s32.totalorder %s70, 3
      %p273 = por %p271, %p272
      %p275 = scmp.ne.s32.totalorder %s258, %s274
      %p276 = scmp.eq.s32.totalorder %s70, 0
      %p277 = por %p275, %p276
      %s278 = sld [smem:[#allocation5 + %s71]]
      %s279 = sld [smem:[#allocation5 + %s83]]
      %s280 = ssub.s32 %s278, %s279
      %p281 = scmp.eq.s32.totalorder %s280, 0
      %s283 = sadd.s32 %s282, 1
      %s284 = scalar_select %p281, %s282, %s283
      %p287 = pneg %p281
      %p288 = scmp.eq.s32.totalorder %s64, 3
      %p289 = por %p287, %p288
      %p290 = scmp.ne.s32.totalorder %s282, %s285
      %p291 = scmp.eq.s32.totalorder %s64, 0
      %p292 = por %p290, %p291
      %p293 = scmp.ne.s32.totalorder %s282, %s285
      %p294 = scmp.eq.s32.totalorder %s69, 3
      %p295 = por %p293, %p294
      %p296 = scmp.ne.s32.totalorder %s285, %s286
      %p297 = scmp.eq.s32.totalorder %s69, 0
      %p298 = por %p296, %p297
      %p299 = scmp.ne.s32.totalorder %s285, %s286
      %p300 = scmp.eq.s32.totalorder %s70, 3
      %p301 = por %p299, %p300
      %p303 = scmp.ne.s32.totalorder %s286, %s302
      %p304 = scmp.eq.s32.totalorder %s70, 0
      %p305 = por %p303, %p304
      %s306 = sld [smem:[#allocation5 + %s71]]
      %s307 = sld [smem:[#allocation5 + %s83]]
      %s308 = ssub.s32 %s306, %s307
      %p309 = scmp.eq.s32.totalorder %s308, 0
      %s311 = sadd.s32 %s310, 1
      %s312 = scalar_select %p309, %s310, %s311
      %p315 = pneg %p309
      %p316 = scmp.eq.s32.totalorder %s64, 3
      %p317 = por %p315, %p316
      %p318 = scmp.ne.s32.totalorder %s310, %s313
      %p319 = scmp.eq.s32.totalorder %s64, 0
      %p320 = por %p318, %p319
      %p321 = scmp.ne.s32.totalorder %s310, %s313
      %p322 = scmp.eq.s32.totalorder %s69, 3
      %p323 = por %p321, %p322
      %p324 = scmp.ne.s32.totalorder %s313, %s314
      %p325 = scmp.eq.s32.totalorder %s69, 0
      %p326 = por %p324, %p325
      %p327 = scmp.ne.s32.totalorder %s313, %s314
      %p328 = scmp.eq.s32.totalorder %s70, 3
      %p329 = por %p327, %p328
      %p331 = scmp.ne.s32.totalorder %s314, %s330
      %p332 = scmp.eq.s32.totalorder %s70, 0
      %p333 = por %p331, %p332
      %s335 = sadd.s32 %s334, 1
      %p338 = scmp.eq.s32.totalorder %s64, 3
      %p339 = scmp.ne.s32.totalorder %s334, %s336
      %p340 = scmp.eq.s32.totalorder %s64, 0
      %p341 = por %p339, %p340
      %p342 = scmp.ne.s32.totalorder %s334, %s336
      %p343 = scmp.eq.s32.totalorder %s69, 3
      %p344 = por %p342, %p343
      %p345 = scmp.ne.s32.totalorder %s336, %s337
      %p346 = scmp.eq.s32.totalorder %s69, 0
      %p347 = por %p345, %p346
      %p348 = scmp.ne.s32.totalorder %s336, %s337
      %p349 = scmp.eq.s32.totalorder %s70, 3
      %p350 = por %p348, %p349
      %p352 = scmp.ne.s32.totalorder %s337, %s351
      %p353 = scmp.eq.s32.totalorder %s70, 0
      %p354 = por %p352, %p353
      %s356 = sadd.s32 %s355, 1
      %p359 = scmp.eq.s32.totalorder %s64, 3
      %p360 = scmp.ne.s32.totalorder %s355, %s357
      %p361 = scmp.eq.s32.totalorder %s64, 0
      %p362 = por %p360, %p361
      %p363 = scmp.ne.s32.totalorder %s355, %s357
      %p364 = scmp.eq.s32.totalorder %s69, 3
      %p365 = por %p363, %p364
      %p366 = scmp.ne.s32.totalorder %s357, %s358
      %p367 = scmp.eq.s32.totalorder %s69, 0
      %p368 = por %p366, %p367
      %p369 = scmp.ne.s32.totalorder %s357, %s358
      %p370 = scmp.eq.s32.totalorder %s70, 3
      %p371 = por %p369, %p370
      %p373 = scmp.ne.s32.totalorder %s358, %s372
      %p374 = scmp.eq.s32.totalorder %s70, 0
      %p375 = por %p373, %p374
      %s377 = sadd.s32 %s376, 1
      %p380 = scmp.eq.s32.totalorder %s64, 3
      %p381 = scmp.ne.s32.totalorder %s376, %s378
      %p382 = scmp.eq.s32.totalorder %s64, 0
      %p383 = por %p381, %p382
      %p384 = scmp.ne.s32.totalorder %s376, %s378
      %p385 = scmp.eq.s32.totalorder %s69, 3
      %p386 = por %p384, %p385
      %p387 = scmp.ne.s32.totalorder %s378, %s379
      %p388 = scmp.eq.s32.totalorder %s69, 0
      %p389 = por %p387, %p388
      %p390 = scmp.ne.s32.totalorder %s378, %s379
      %p391 = scmp.eq.s32.totalorder %s70, 3
      %p392 = por %p390, %p391
      %p394 = scmp.ne.s32.totalorder %s379, %s393
      %p395 = scmp.eq.s32.totalorder %s70, 0
      %p396 = por %p394, %p395
      %s398 = sadd.s32 %s397, 1
      %p401 = scmp.eq.s32.totalorder %s64, 3
      %p402 = scmp.ne.s32.totalorder %s397, %s399
      %p403 = scmp.eq.s32.totalorder %s64, 0
      %p404 = por %p402, %p403
      %p405 = scmp.ne.s32.totalorder %s397, %s399
      %p406 = scmp.eq.s32.totalorder %s69, 3
      %p407 = por %p405, %p406
      %p408 = scmp.ne.s32.totalorder %s399, %s400
      %p409 = scmp.eq.s32.totalorder %s69, 0
      %p410 = por %p408, %p409
      %p411 = scmp.ne.s32.totalorder %s399, %s400
      %p412 = scmp.eq.s32.totalorder %s70, 3
      %p413 = por %p411, %p412
      %p415 = scmp.ne.s32.totalorder %s400, %s414
      %p416 = scmp.eq.s32.totalorder %s70, 0
      %p417 = por %p415, %p416
      %s419 = sadd.s32 %s418, 1
      %p422 = scmp.eq.s32.totalorder %s64, 3
      %p423 = scmp.ne.s32.totalorder %s418, %s420
      %p424 = scmp.eq.s32.totalorder %s64, 0
      %p425 = por %p423, %p424
      %p426 = scmp.ne.s32.totalorder %s418, %s420
      %p427 = scmp.eq.s32.totalorder %s69, 3
      %p428 = por %p426, %p427
      %p429 = scmp.ne.s32.totalorder %s420, %s421
      %p430 = scmp.eq.s32.totalorder %s69, 0
      %p431 = por %p429, %p430
      %p432 = scmp.ne.s32.totalorder %s420, %s421
      %p433 = scmp.eq.s32.totalorder %s70, 3
      %p434 = por %p432, %p433
      %p436 = scmp.ne.s32.totalorder %s421, %s435
      %p437 = scmp.eq.s32.totalorder %s70, 0
      %p438 = por %p436, %p437
      %s440 = sadd.s32 %s439, 1
      %p443 = scmp.eq.s32.totalorder %s64, 3
      %p444 = scmp.ne.s32.totalorder %s439, %s441
      %p445 = scmp.eq.s32.totalorder %s64, 0
      %p446 = por %p444, %p445
      %p447 = scmp.ne.s32.totalorder %s439, %s441
      %p448 = scmp.eq.s32.totalorder %s69, 3
      %p449 = por %p447, %p448
      %p450 = scmp.ne.s32.totalorder %s441, %s442
      %p451 = scmp.eq.s32.totalorder %s69, 0
      %p452 = por %p450, %p451
      %p453 = scmp.ne.s32.totalorder %s441, %s442
      %p454 = scmp.eq.s32.totalorder %s70, 3
      %p455 = por %p453, %p454
      %p457 = scmp.ne.s32.totalorder %s442, %s456
      %p458 = scmp.eq.s32.totalorder %s70, 0
      %p459 = por %p457, %p458
      %s461 = sadd.s32 %s460, 1
      %p464 = scmp.eq.s32.totalorder %s64, 3
      %p465 = scmp.ne.s32.totalorder %s460, %s462
      %p466 = scmp.eq.s32.totalorder %s64, 0
      %p467 = por %p465, %p466
      %p468 = scmp.ne.s32.totalorder %s460, %s462
      %p469 = scmp.eq.s32.totalorder %s69, 3
      %p470 = por %p468, %p469
      %p471 = scmp.ne.s32.totalorder %s462, %s463
      %p472 = scmp.eq.s32.totalorder %s69, 0
      %p473 = por %p471, %p472
      %p474 = scmp.ne.s32.totalorder %s462, %s463
      %p475 = scmp.eq.s32.totalorder %s70, 3
      %p476 = por %p474, %p475
      %p478 = scmp.ne.s32.totalorder %s463, %s477
      %p479 = scmp.eq.s32.totalorder %s70, 0
      %p480 = por %p478, %p479
      %s482 = sadd.s32 %s481, 1
      %p485 = scmp.eq.s32.totalorder %s64, 3
      %p486 = scmp.ne.s32.totalorder %s481, %s483
      %p487 = scmp.eq.s32.totalorder %s64, 0
      %p488 = por %p486, %p487
      %p489 = scmp.ne.s32.totalorder %s481, %s483
      %p490 = scmp.eq.s32.totalorder %s69, 3
      %p491 = por %p489, %p490
      %p492 = scmp.ne.s32.totalorder %s483, %s484
      %p493 = scmp.eq.s32.totalorder %s69, 0
      %p494 = por %p492, %p493
      %p495 = scmp.ne.s32.totalorder %s483, %s484
      %p496 = scmp.eq.s32.totalorder %s70, 3
      %p497 = por %p495, %p496
      %p499 = scmp.ne.s32.totalorder %s484, %s498
      %p500 = scmp.eq.s32.totalorder %s70, 0
      %p501 = por %p499, %p500
      %s503 = sadd.s32 %s502, 1
      %p506 = scmp.eq.s32.totalorder %s64, 3
      %p507 = scmp.ne.s32.totalorder %s502, %s504
      %p508 = scmp.eq.s32.totalorder %s64, 0
      %p509 = por %p507, %p508
      %p510 = scmp.ne.s32.totalorder %s502, %s504
      %p511 = scmp.eq.s32.totalorder %s69, 3
      %p512 = por %p510, %p511
      %p513 = scmp.ne.s32.totalorder %s504, %s505
      %p514 = scmp.eq.s32.totalorder %s69, 0
      %p515 = por %p513, %p514
      %p516 = scmp.ne.s32.totalorder %s504, %s505
      %p517 = scmp.eq.s32.totalorder %s70, 3
      %p518 = por %p516, %p517
      %p520 = scmp.ne.s32.totalorder %s505, %s519
      %p521 = scmp.eq.s32.totalorder %s70, 0
      %p522 = por %p520, %p521
      %s524 = sadd.s32 %s523, 1
      %p527 = scmp.eq.s32.totalorder %s64, 3
      %p528 = scmp.ne.s32.totalorder %s523, %s525
      %p529 = scmp.eq.s32.totalorder %s64, 0
      %p530 = por %p528, %p529
      %p531 = scmp.ne.s32.totalorder %s523, %s525
      %p532 = scmp.eq.s32.totalorder %s69, 3
      %p533 = por %p531, %p532
      %p534 = scmp.ne.s32.totalorder %s525, %s526
      %p535 = scmp.eq.s32.totalorder %s69, 0
      %p536 = por %p534, %p535
      %p537 = scmp.ne.s32.totalorder %s525, %s526
      %p538 = scmp.eq.s32.totalorder %s70, 3
      %p539 = por %p537, %p538
      %p541 = scmp.ne.s32.totalorder %s526, %s540
      %p542 = scmp.eq.s32.totalorder %s70, 0
      %p543 = por %p541, %p542
      %s545 = sadd.s32 %s544, 1
      %p548 = scmp.eq.s32.totalorder %s64, 3
      %p549 = scmp.ne.s32.totalorder %s544, %s546
      %p550 = scmp.eq.s32.totalorder %s64, 0
      %p551 = por %p549, %p550
      %p552 = scmp.ne.s32.totalorder %s544, %s546
      %p553 = scmp.eq.s32.totalorder %s69, 3
      %p554 = por %p552, %p553
      %p555 = scmp.ne.s32.totalorder %s546, %s547
      %p556 = scmp.eq.s32.totalorder %s69, 0
      %p557 = por %p555, %p556
      %p558 = scmp.ne.s32.totalorder %s546, %s547
      %p559 = scmp.eq.s32.totalorder %s70, 3
      %p560 = por %p558, %p559
      %p562 = scmp.ne.s32.totalorder %s547, %s561
      %p563 = scmp.eq.s32.totalorder %s70, 0
      %p564 = por %p562, %p563
      %s566 = sadd.s32 %s565, 1
      %p569 = scmp.eq.s32.totalorder %s64, 3
      %p570 = scmp.ne.s32.totalorder %s565, %s567
      %p571 = scmp.eq.s32.totalorder %s64, 0
      %p572 = por %p570, %p571
      %p573 = scmp.ne.s32.totalorder %s565, %s567
      %p574 = scmp.eq.s32.totalorder %s69, 3
      %p575 = por %p573, %p574
      %p576 = scmp.ne.s32.totalorder %s567, %s568
      %p577 = scmp.eq.s32.totalorder %s69, 0
      %p578 = por %p576, %p577
      %p579 = scmp.ne.s32.totalorder %s567, %s568
      %p580 = scmp.eq.s32.totalorder %s70, 3
      %p581 = por %p579, %p580
      %p583 = scmp.ne.s32.totalorder %s568, %s582
      %p584 = scmp.eq.s32.totalorder %s70, 0
      %p585 = por %p583, %p584
      %s587 = sadd.s32 %s586, 1
      %p590 = scmp.eq.s32.totalorder %s64, 3
      %p591 = scmp.ne.s32.totalorder %s586, %s588
      %p592 = scmp.eq.s32.totalorder %s64, 0
      %p593 = por %p591, %p592
      %p594 = scmp.ne.s32.totalorder %s586, %s588
      %p595 = scmp.eq.s32.totalorder %s69, 3
      %p596 = por %p594, %p595
      %p597 = scmp.ne.s32.totalorder %s588, %s589
      %p598 = scmp.eq.s32.totalorder %s69, 0
      %p599 = por %p597, %p598
      %p600 = scmp.ne.s32.totalorder %s588, %s589
      %p601 = scmp.eq.s32.totalorder %s70, 3
      %p602 = por %p600, %p601
      %p604 = scmp.ne.s32.totalorder %s589, %s603
      %p605 = scmp.eq.s32.totalorder %s70, 0
      %p606 = por %p604, %p605
      %s607 = ssub.s32 %s71, %s83
      %p608 = scmp.eq.s32.totalorder %s607, 0
      %s610 = sadd.s32 %s609, 1
      %s611 = scalar_select %p608, %s609, %s610
      %p614 = pneg %p608
      %p615 = scmp.eq.s32.totalorder %s64, 3
      %p616 = por %p614, %p615
      %p617 = scmp.ne.s32.totalorder %s609, %s612
      %p618 = scmp.eq.s32.totalorder %s64, 0
      %p619 = por %p617, %p618
      %p620 = scmp.ne.s32.totalorder %s609, %s612
      %p621 = scmp.eq.s32.totalorder %s69, 3
      %p622 = por %p620, %p621
      %p623 = scmp.ne.s32.totalorder %s612, %s613
      %p624 = scmp.eq.s32.totalorder %s69, 0
      %p625 = por %p623, %p624
      %p626 = scmp.ne.s32.totalorder %s612, %s613
      %p627 = scmp.eq.s32.totalorder %s70, 3
      %p628 = por %p626, %p627
      %p630 = scmp.ne.s32.totalorder %s613, %s629
      %p631 = scmp.eq.s32.totalorder %s70, 0
      %p632 = por %p630, %p631
      %s633 = ssub.s32 %s71, %s83
      %p634 = scmp.eq.s32.totalorder %s633, 0
      %s636 = sadd.s32 %s635, 1
      %s637 = scalar_select %p634, %s635, %s636
      %p640 = pneg %p634
      %p641 = scmp.eq.s32.totalorder %s64, 3
      %p642 = por %p640, %p641
      %p643 = scmp.ne.s32.totalorder %s635, %s638
      %p644 = scmp.eq.s32.totalorder %s64, 0
      %p645 = por %p643, %p644
      %p646 = scmp.ne.s32.totalorder %s635, %s638
      %p647 = scmp.eq.s32.totalorder %s69, 3
      %p648 = por %p646, %p647
      %p649 = scmp.ne.s32.totalorder %s638, %s639
      %p650 = scmp.eq.s32.totalorder %s69, 0
      %p651 = por %p649, %p650
      %p652 = scmp.ne.s32.totalorder %s638, %s639
      %p653 = scmp.eq.s32.totalorder %s70, 3
      %p654 = por %p652, %p653
      %p656 = scmp.ne.s32.totalorder %s639, %s655
      %p657 = scmp.eq.s32.totalorder %s70, 0
      %p658 = por %p656, %p657
      %s659 = ssub.s32 %s71, %s83
      %p660 = scmp.eq.s32.totalorder %s659, 0
      %s662 = sadd.s32 %s661, 1
      %s663 = scalar_select %p660, %s661, %s662
      %p666 = pneg %p660
      %p667 = scmp.eq.s32.totalorder %s64, 3
      %p668 = por %p666, %p667
      %p669 = scmp.ne.s32.totalorder %s661, %s664
      %p670 = scmp.eq.s32.totalorder %s64, 0
      %p671 = por %p669, %p670
      %p672 = scmp.ne.s32.totalorder %s661, %s664
      %p673 = scmp.eq.s32.totalorder %s69, 3
      %p674 = por %p672, %p673
      %p675 = scmp.ne.s32.totalorder %s664, %s665
      %p676 = scmp.eq.s32.totalorder %s69, 0
      %p677 = por %p675, %p676
      %p678 = scmp.ne.s32.totalorder %s664, %s665
      %p679 = scmp.eq.s32.totalorder %s70, 3
      %p680 = por %p678, %p679
      %p682 = scmp.ne.s32.totalorder %s665, %s681
      %p683 = scmp.eq.s32.totalorder %s70, 0
      %p684 = por %p682, %p683
      %p685 = scmp.le.s32.totalorder 1, %s64
      %p686 = scmp.lt.s32.totalorder %s64, 5
      %p687 = pnand %p685, %p686
      %p688 = pneg %p687
      // Predicated region
      $region9: #{tpu_custom_call.1} parent=5 // pred_check
        _
      $region10: #{tpu_custom_call.1} parent=5 // pred_check_branch
        %690 = sbr.rel (%p687) target = $region12
      $region11: #{tpu_custom_call.1} parent=5 // pred_region
        %s691 = ssub.s32 %s64, 1
        // Predicated region
        $region13: #{tpu_custom_call.1} parent=11 // pred_check
          %p692 = pneg %p347
        $region14: #{tpu_custom_call.1} parent=11 // pred_check_branch
          %694 = sbr.rel (%p692) target = $region16
        $region15: #{tpu_custom_call.1} parent=11 // pred_region
          %s696 = ssub.s32 512, 512
          %697 = vsyncadd [#allocation22], %s696
          %s698 = sshll.u32 [#allocation21], 4
          %s699 = int_to_ptr.vmem [resolvable:$true] %s698
          %704 = dma.hbm_to_vmem [thread:$0]  %s10, 512, %s699, [#allocation22], 128, 128, 8
        $region16: #{tpu_custom_call.1} parent=11 // pred_fallthru
          _
        // Predicated region
        $region17: #{tpu_custom_call.1} parent=11 // pred_check
          %p705 = pneg %p368
        $region18: #{tpu_custom_call.1} parent=11 // pred_check_branch
          %707 = sbr.rel (%p705) target = $region20
        $region19: #{tpu_custom_call.1} parent=11 // pred_region
          %s709 = ssub.s32 128, 128
          %710 = vsyncadd [#allocation22], %s709
          %s712 = sshll.u32 [#allocation23], 4
          %s713 = int_to_ptr.vmem [resolvable:$true] %s712
          %715 = dma.hbm_to_vmem [thread:$0]  %s11, 128, %s713, [#allocation22]
        $region20: #{tpu_custom_call.1} parent=11 // pred_fallthru
          _
        // Predicated region
        $region21: #{tpu_custom_call.1} parent=11 // pred_check
          %p716 = pneg %p389
        $region22: #{tpu_custom_call.1} parent=11 // pred_check_branch
          %718 = sbr.rel (%p716) target = $region24
        $region23: #{tpu_custom_call.1} parent=11 // pred_region
          %s720 = ssub.s32 16, 16
          %721 = vsyncadd [#allocation25], %s720
          %s723 = sshll.u32 [#allocation24], 4
          %s724 = int_to_ptr.vmem [resolvable:$true] %s723
          %726 = dma.hbm_to_vmem [thread:$0]  %s12, 16, %s724, [#allocation25]
        $region24: #{tpu_custom_call.1} parent=11 // pred_fallthru
          _
        // Predicated region
        $region25: #{tpu_custom_call.1} parent=11 // pred_check
          %p727 = pneg %p410
        $region26: #{tpu_custom_call.1} parent=11 // pred_check_branch
          %729 = sbr.rel (%p727) target = $region28
        $region27: #{tpu_custom_call.1} parent=11 // pred_region
          %s731 = ssub.s32 16, 16
          %732 = vsyncadd [#allocation25], %s731
          %s734 = sshll.u32 [#allocation26], 4
          %s735 = int_to_ptr.vmem [resolvable:$true] %s734
          %737 = dma.hbm_to_vmem [thread:$0]  %s13, 16, %s735, [#allocation25]
        $region28: #{tpu_custom_call.1} parent=11 // pred_fallthru
          _
        // Predicated region
        $region29: #{tpu_custom_call.1} parent=11 // pred_check
          %p738 = pneg %p431
        $region30: #{tpu_custom_call.1} parent=11 // pred_check_branch
          %740 = sbr.rel (%p738) target = $region32
        $region31: #{tpu_custom_call.1} parent=11 // pred_region
          %s742 = ssub.s32 16, 16
          %743 = vsyncadd [#allocation28], %s742
          %s745 = sshll.u32 [#allocation27], 4
          %s746 = int_to_ptr.vmem [resolvable:$true] %s745
          %748 = dma.hbm_to_vmem [thread:$0]  %s14, 16, %s746, [#allocation28]
        $region32: #{tpu_custom_call.1} parent=11 // pred_fallthru
          _
        // Predicated region
        $region33: #{tpu_custom_call.1} parent=11 // pred_check
          %p749 = pneg %p452
        $region34: #{tpu_custom_call.1} parent=11 // pred_check_branch
          %751 = sbr.rel (%p749) target = $region36
        $region35: #{tpu_custom_call.1} parent=11 // pred_region
          %s753 = ssub.s32 512, 512
          %754 = vsyncadd [#allocation28], %s753
          %s755 = sshll.u32 [#allocation29], 4
          %s756 = int_to_ptr.vmem [resolvable:$true] %s755
          %761 = dma.hbm_to_vmem [thread:$0]  %s15, 512, %s756, [#allocation28], 128, 128, 8
        $region36: #{tpu_custom_call.1} parent=11 // pred_fallthru
          _
        // Predicated region
        $region37: #{tpu_custom_call.1} parent=11 // pred_check
          %p762 = pneg %p473
        $region38: #{tpu_custom_call.1} parent=11 // pred_check_branch
          %764 = sbr.rel (%p762) target = $region40
        $region39: #{tpu_custom_call.1} parent=11 // pred_region
          %s766 = ssub.s32 16, 16
          %767 = vsyncadd [#allocation31], %s766
          %s769 = sshll.u32 [#allocation30], 4
          %s770 = int_to_ptr.vmem [resolvable:$true] %s769
          %772 = dma.hbm_to_vmem [thread:$0]  %s16, 16, %s770, [#allocation31]
        $region40: #{tpu_custom_call.1} parent=11 // pred_fallthru
          _
        // Predicated region
        $region41: #{tpu_custom_call.1} parent=11 // pred_check
          %p773 = pneg %p494
        $region42: #{tpu_custom_call.1} parent=11 // pred_check_branch
          %775 = sbr.rel (%p773) target = $region44
        $region43: #{tpu_custom_call.1} parent=11 // pred_region
          %s777 = ssub.s32 16, 16
          %778 = vsyncadd [#allocation31], %s777
          %s780 = sshll.u32 [#allocation32], 4
          %s781 = int_to_ptr.vmem [resolvable:$true] %s780
          %783 = dma.hbm_to_vmem [thread:$0]  %s17, 16, %s781, [#allocation31]
        $region44: #{tpu_custom_call.1} parent=11 // pred_fallthru
          _
        // Predicated region
        $region45: #{tpu_custom_call.1} parent=11 // pred_check
          %p784 = pneg %p515
        $region46: #{tpu_custom_call.1} parent=11 // pred_check_branch
          %786 = sbr.rel (%p784) target = $region48
        $region47: #{tpu_custom_call.1} parent=11 // pred_region
          %s788 = ssub.s32 16, 16
          %789 = vsyncadd [#allocation34], %s788
          %s791 = sshll.u32 [#allocation33], 4
          %s792 = int_to_ptr.vmem [resolvable:$true] %s791
          %794 = dma.hbm_to_vmem [thread:$0]  %s18, 16, %s792, [#allocation34]
        $region48: #{tpu_custom_call.1} parent=11 // pred_fallthru
          _
        // Predicated region
        $region49: #{tpu_custom_call.1} parent=11 // pred_check
          %p795 = pneg %p536
        $region50: #{tpu_custom_call.1} parent=11 // pred_check_branch
          %797 = sbr.rel (%p795) target = $region52
        $region51: #{tpu_custom_call.1} parent=11 // pred_region
          %s799 = ssub.s32 512, 512
          %800 = vsyncadd [#allocation34], %s799
          %s801 = sshll.u32 [#allocation35], 4
          %s802 = int_to_ptr.vmem [resolvable:$true] %s801
          %807 = dma.hbm_to_vmem [thread:$0]  %s19, 512, %s802, [#allocation34], 128, 128, 8
        $region52: #{tpu_custom_call.1} parent=11 // pred_fallthru
          _
        // Predicated region
        $region53: #{tpu_custom_call.1} parent=11 // pred_check
          %p808 = pneg %p557
        $region54: #{tpu_custom_call.1} parent=11 // pred_check_branch
          %810 = sbr.rel (%p808) target = $region56
        $region55: #{tpu_custom_call.1} parent=11 // pred_region
          %s812 = ssub.s32 16, 16
          %813 = vsyncadd [#allocation37], %s812
          %s815 = sshll.u32 [#allocation36], 4
          %s816 = int_to_ptr.vmem [resolvable:$true] %s815
          %818 = dma.hbm_to_vmem [thread:$0]  %s20, 16, %s816, [#allocation37]
        $region56: #{tpu_custom_call.1} parent=11 // pred_fallthru
          _
        // Predicated region
        $region57: #{tpu_custom_call.1} parent=11 // pred_check
          %p819 = pneg %p578
        $region58: #{tpu_custom_call.1} parent=11 // pred_check_branch
          %821 = sbr.rel (%p819) target = $region60
        $region59: #{tpu_custom_call.1} parent=11 // pred_region
          %s823 = ssub.s32 512, 512
          %824 = vsyncadd [#allocation37], %s823
          %s825 = sshll.u32 [#allocation38], 4
          %s826 = int_to_ptr.vmem [resolvable:$true] %s825
          %831 = dma.hbm_to_vmem [thread:$0]  %s21, 512, %s826, [#allocation37], 128, 128, 8
        $region60: #{tpu_custom_call.1} parent=11 // pred_fallthru
          _
        // Predicated region
        $region61: #{tpu_custom_call.1} parent=11 // pred_check
          %p832 = pneg %p599
        $region62: #{tpu_custom_call.1} parent=11 // pred_check_branch
          %834 = sbr.rel (%p832) target = $region64
        $region63: #{tpu_custom_call.1} parent=11 // pred_region
          %s836 = ssub.s32 16, 16
          %837 = vsyncadd [#allocation40], %s836
          %s839 = sshll.u32 [#allocation39], 4
          %s840 = int_to_ptr.vmem [resolvable:$true] %s839
          %842 = dma.hbm_to_vmem [thread:$0]  %s22, 16, %s840, [#allocation40]
        $region64: #{tpu_custom_call.1} parent=11 // pred_fallthru
          _
      $region12: #{tpu_custom_call.1} parent=5 // pred_fallthru
        _
      %p843 = scmp.lt.s32.totalorder %s64, 4
      // Predicated region
      $region65: #{tpu_custom_call.1} parent=5 // pred_check
        %p844 = pneg %p843
      $region66: #{tpu_custom_call.1} parent=5 // pred_check_branch
        %846 = sbr.rel (%p844) target = $region68
      $region67: #{tpu_custom_call.1} parent=5 // pred_region
        // Predicated region
        $region69: #{tpu_custom_call.1} parent=67 // pred_check
          %p847 = pneg %p98
        $region70: #{tpu_custom_call.1} parent=67 // pred_check_branch
          %849 = sbr.rel (%p847) target = $region72
        $region71: #{tpu_custom_call.1} parent=67 // pred_region
          %s850 = sand.u32 %s88, 1
          %s851 = scalar_lea.sflag [#allocation7], %s850
          %s852 = sand.u32 %s88, 1
          %s853 = smul.addr %s852, 8
          %s854 = scalar_lea.vmem [#allocation6], %s853
          %s856 = ssub.s32 128, 128
          %857 = vsyncadd %s851, %s856
          %s858 = smul.addr %s71, 2
          %s859 = sadd.s32 %s72, %s858
          %s860 = smul.addr %s859, 128
          %s861 = scalar_lea.hbm %s1, %s860
          %s863 = sshll.u32 %s854, 4
          %s864 = int_to_ptr.vmem [resolvable:$true] %s863
          %866 = dma.hbm_to_vmem [thread:$0]  %s861, 128, %s864, %s851
        $region72: #{tpu_custom_call.1} parent=67 // pred_fallthru
          _
        // Predicated region
        $region73: #{tpu_custom_call.1} parent=67 // pred_check
          %p867 = pneg %p126
        $region74: #{tpu_custom_call.1} parent=67 // pred_check_branch
          %869 = sbr.rel (%p867) target = $region76
        $region75: #{tpu_custom_call.1} parent=67 // pred_region
          %s870 = sand.u32 %s64, 1
          %s871 = scalar_lea.sflag [#allocation10], %s870
          %s872 = sand.u32 %s116, 1
          %s873 = smul.addr %s872, 8
          %s874 = scalar_lea.vmem [#allocation9], %s873
          %s876 = ssub.s32 128, 128
          %877 = vsyncadd %s871, %s876
          %s878 = smul.addr %s71, 2
          %s879 = sadd.s32 %s72, %s878
          %s880 = smul.addr %s879, 128
          %s881 = scalar_lea.hbm %s2, %s880
          %s883 = sshll.u32 %s874, 4
          %s884 = int_to_ptr.vmem [resolvable:$true] %s883
          %886 = dma.hbm_to_vmem [thread:$0]  %s881, 128, %s884, %s871
        $region76: #{tpu_custom_call.1} parent=67 // pred_fallthru
          _
        // Predicated region
        $region77: #{tpu_custom_call.1} parent=67 // pred_check
          %p887 = pneg %p152
        $region78: #{tpu_custom_call.1} parent=67 // pred_check_branch
          %889 = sbr.rel (%p887) target = $region80
        $region79: #{tpu_custom_call.1} parent=67 // pred_region
          %s890 = sand.u32 %s64, 1
          %s891 = scalar_lea.sflag [#allocation10], %s890
          %s892 = sand.u32 %s142, 1
          %s893 = scalar_lea.vmem [#allocation11], %s892
          %s895 = ssub.s32 16, 16
          %896 = vsyncadd %s891, %s895
          %s897 = smul.addr %s71, 16
          %s898 = scalar_lea.hbm %s3, %s897
          %s900 = sshll.u32 %s893, 4
          %s901 = int_to_ptr.vmem [resolvable:$true] %s900
          %903 = dma.hbm_to_vmem [thread:$0]  %s898, 16, %s901, %s891
        $region80: #{tpu_custom_call.1} parent=67 // pred_fallthru
          _
        // Predicated region
        $region81: #{tpu_custom_call.1} parent=67 // pred_check
          %p904 = pneg %p180
        $region82: #{tpu_custom_call.1} parent=67 // pred_check_branch
          %906 = sbr.rel (%p904) target = $region84
        $region83: #{tpu_custom_call.1} parent=67 // pred_region
          %s907 = sand.u32 %s64, 1
          %s908 = scalar_lea.sflag [#allocation13], %s907
          %s909 = sand.u32 %s170, 1
          %s910 = smul.addr %s909, 32
          %s911 = scalar_lea.vmem [#allocation12], %s910
          %s912 = sld [smem:[#allocation5 + %s71]]
          %s914 = ssub.s32 512, 512
          %915 = vsyncadd %s908, %s914
          %s916 = smul.addr %s912, 4
          %s917 = smul.addr %s916, 128
          %s918 = scalar_lea.hbm %s4, %s917
          %s919 = sshll.u32 %s911, 4
          %s920 = int_to_ptr.vmem [resolvable:$true] %s919
          %925 = dma.hbm_to_vmem [thread:$0]  %s918, 512, %s920, %s908, 128, 128, 8
        $region84: #{tpu_custom_call.1} parent=67 // pred_fallthru
          _
        // Predicated region
        $region85: #{tpu_custom_call.1} parent=67 // pred_check
          %p926 = pneg %p208
        $region86: #{tpu_custom_call.1} parent=67 // pred_check_branch
          %928 = sbr.rel (%p926) target = $region88
        $region87: #{tpu_custom_call.1} parent=67 // pred_region
          %s929 = sand.u32 %s64, 1
          %s930 = scalar_lea.sflag [#allocation13], %s929
          %s931 = sand.u32 %s198, 1
          %s932 = scalar_lea.vmem [#allocation14], %s931
          %s933 = sld [smem:[#allocation5 + %s71]]
          %s935 = ssub.s32 16, 16
          %936 = vsyncadd %s930, %s935
          %s937 = smul.addr %s933, 16
          %s938 = scalar_lea.hbm %s5, %s937
          %s940 = sshll.u32 %s932, 4
          %s941 = int_to_ptr.vmem [resolvable:$true] %s940
          %943 = dma.hbm_to_vmem [thread:$0]  %s938, 16, %s941, %s930
        $region88: #{tpu_custom_call.1} parent=67 // pred_fallthru
          _
        // Predicated region
        $region89: #{tpu_custom_call.1} parent=67 // pred_check
          %p944 = pneg %p236
        $region90: #{tpu_custom_call.1} parent=67 // pred_check_branch
          %946 = sbr.rel (%p944) target = $region92
        $region91: #{tpu_custom_call.1} parent=67 // pred_region
          %s947 = sand.u32 %s64, 1
          %s948 = scalar_lea.sflag [#allocation16], %s947
          %s949 = sand.u32 %s226, 1
          %s950 = scalar_lea.vmem [#allocation15], %s949
          %s951 = sld [smem:[#allocation5 + %s71]]
          %s953 = ssub.s32 16, 16
          %954 = vsyncadd %s948, %s953
          %s955 = smul.addr %s951, 16
          %s956 = scalar_lea.hbm %s6, %s955
          %s958 = sshll.u32 %s950, 4
          %s959 = int_to_ptr.vmem [resolvable:$true] %s958
          %961 = dma.hbm_to_vmem [thread:$0]  %s956, 16, %s959, %s948
        $region92: #{tpu_custom_call.1} parent=67 // pred_fallthru
          _
        // Predicated region
        $region93: #{tpu_custom_call.1} parent=67 // pred_check
          %p962 = pneg %p264
        $region94: #{tpu_custom_call.1} parent=67 // pred_check_branch
          %964 = sbr.rel (%p962) target = $region96
        $region95: #{tpu_custom_call.1} parent=67 // pred_region
          %s965 = sand.u32 %s64, 1
          %s966 = scalar_lea.sflag [#allocation16], %s965
          %s967 = sand.u32 %s254, 1
          %s968 = scalar_lea.vmem [#allocation17], %s967
          %s969 = sld [smem:[#allocation5 + %s71]]
          %s971 = ssub.s32 16, 16
          %972 = vsyncadd %s966, %s971
          %s973 = smul.addr %s969, 16
          %s974 = scalar_lea.hbm %s7, %s973
          %s976 = sshll.u32 %s968, 4
          %s977 = int_to_ptr.vmem [resolvable:$true] %s976
          %979 = dma.hbm_to_vmem [thread:$0]  %s974, 16, %s977, %s966
        $region96: #{tpu_custom_call.1} parent=67 // pred_fallthru
          _
        // Predicated region
        $region97: #{tpu_custom_call.1} parent=67 // pred_check
          %p980 = pneg %p292
        $region98: #{tpu_custom_call.1} parent=67 // pred_check_branch
          %982 = sbr.rel (%p980) target = $region100
        $region99: #{tpu_custom_call.1} parent=67 // pred_region
          %s983 = sand.u32 %s64, 1
          %s984 = scalar_lea.sflag [#allocation19], %s983
          %s985 = sand.u32 %s282, 1
          %s986 = smul.addr %s985, 32
          %s987 = scalar_lea.vmem [#allocation18], %s986
          %s988 = sld [smem:[#allocation5 + %s71]]
          %s990 = ssub.s32 512, 512
          %991 = vsyncadd %s984, %s990
          %s992 = smul.addr %s988, 4
          %s993 = smul.addr %s992, 128
          %s994 = scalar_lea.hbm %s8, %s993
          %s995 = sshll.u32 %s987, 4
          %s996 = int_to_ptr.vmem [resolvable:$true] %s995
          %1001 = dma.hbm_to_vmem [thread:$0]  %s994, 512, %s996, %s984, 128, 128, 8
        $region100: #{tpu_custom_call.1} parent=67 // pred_fallthru
          _
        // Predicated region
        $region101: #{tpu_custom_call.1} parent=67 // pred_check
          %p1002 = pneg %p320
        $region102: #{tpu_custom_call.1} parent=67 // pred_check_branch
          %1004 = sbr.rel (%p1002) target = $region104
        $region103: #{tpu_custom_call.1} parent=67 // pred_region
          %s1005 = sand.u32 %s64, 1
          %s1006 = scalar_lea.sflag [#allocation19], %s1005
          %s1007 = sand.u32 %s310, 1
          %s1008 = scalar_lea.vmem [#allocation20], %s1007
          %s1009 = sld [smem:[#allocation5 + %s71]]
          %s1011 = ssub.s32 16, 16
          %1012 = vsyncadd %s1006, %s1011
          %s1013 = smul.addr %s1009, 16
          %s1014 = scalar_lea.hbm %s9, %s1013
          %s1016 = sshll.u32 %s1008, 4
          %s1017 = int_to_ptr.vmem [resolvable:$true] %s1016
          %1019 = dma.hbm_to_vmem [thread:$0]  %s1014, 16, %s1017, %s1006
        $region104: #{tpu_custom_call.1} parent=67 // pred_fallthru
          _
      $region68: #{tpu_custom_call.1} parent=5 // pred_fallthru
        _
      %p1020 = scmp.le.s32.totalorder 1, %s64
      %p1021 = scmp.lt.s32.totalorder %s64, 5
      %p1022 = pnand %p1020, %p1021
      %p1023 = pneg %p1022
      // Predicated region
      $region105: #{tpu_custom_call.1} parent=5 // pred_check
        _
      $region106: #{tpu_custom_call.1} parent=5 // pred_check_branch
        %1025 = sbr.rel (%p1022) target = $region108
      $region107: #{tpu_custom_call.1} parent=5 // pred_region
        %s1026 = ssub.s32 %s64, 1
        %s1027 = sand.u32 %s91, 1
        %s1028 = scalar_lea.sflag [#allocation7], %s1027
        %s1029 = sand.u32 %s91, 1
        %s1030 = smul.addr %s1029, 8
        %s1031 = scalar_lea.vmem [#allocation6], %s1030
        // Predicated region
        $region109: #{tpu_custom_call.1} parent=107 // pred_check
          %p1032 = pneg %p104
        $region110: #{tpu_custom_call.1} parent=107 // pred_check_branch
          %1034 = sbr.rel (%p1032) target = $region112
        $region111: #{tpu_custom_call.1} parent=107 // pred_region
          %1035 = dma.done %s1028, 128
        $region112: #{tpu_custom_call.1} parent=107 // pred_fallthru
          _
        %s1036 = sand.u32 %s69, 1
        %s1037 = scalar_lea.sflag [#allocation10], %s1036
        %s1038 = sand.u32 %s119, 1
        %s1039 = smul.addr %s1038, 8
        %s1040 = scalar_lea.vmem [#allocation9], %s1039
        // Predicated region
        $region113: #{tpu_custom_call.1} parent=107 // pred_check
          %p1041 = pneg %p132
        $region114: #{tpu_custom_call.1} parent=107 // pred_check_branch
          %1043 = sbr.rel (%p1041) target = $region116
        $region115: #{tpu_custom_call.1} parent=107 // pred_region
          %1044 = dma.done %s1037, 128
        $region116: #{tpu_custom_call.1} parent=107 // pred_fallthru
          _
        %s1045 = sand.u32 %s69, 1
        %s1046 = scalar_lea.sflag [#allocation10], %s1045
        %s1047 = sand.u32 %s145, 1
        %s1048 = scalar_lea.vmem [#allocation11], %s1047
        // Predicated region
        $region117: #{tpu_custom_call.1} parent=107 // pred_check
          %p1049 = pneg %p158
        $region118: #{tpu_custom_call.1} parent=107 // pred_check_branch
          %1051 = sbr.rel (%p1049) target = $region120
        $region119: #{tpu_custom_call.1} parent=107 // pred_region
          %1052 = dma.done %s1046, 16
        $region120: #{tpu_custom_call.1} parent=107 // pred_fallthru
          _
        %s1053 = sand.u32 %s69, 1
        %s1054 = scalar_lea.sflag [#allocation13], %s1053
        %s1055 = sand.u32 %s173, 1
        %s1056 = smul.addr %s1055, 32
        %s1057 = scalar_lea.vmem [#allocation12], %s1056
        // Predicated region
        $region121: #{tpu_custom_call.1} parent=107 // pred_check
          %p1058 = pneg %p186
        $region122: #{tpu_custom_call.1} parent=107 // pred_check_branch
          %1060 = sbr.rel (%p1058) target = $region124
        $region123: #{tpu_custom_call.1} parent=107 // pred_region
          %1061 = dma.done %s1054, 512
        $region124: #{tpu_custom_call.1} parent=107 // pred_fallthru
          _
        %s1062 = sand.u32 %s69, 1
        %s1063 = scalar_lea.sflag [#allocation13], %s1062
        %s1064 = sand.u32 %s201, 1
        %s1065 = scalar_lea.vmem [#allocation14], %s1064
        // Predicated region
        $region125: #{tpu_custom_call.1} parent=107 // pred_check
          %p1066 = pneg %p214
        $region126: #{tpu_custom_call.1} parent=107 // pred_check_branch
          %1068 = sbr.rel (%p1066) target = $region128
        $region127: #{tpu_custom_call.1} parent=107 // pred_region
          %1069 = dma.done %s1063, 16
        $region128: #{tpu_custom_call.1} parent=107 // pred_fallthru
          _
        %s1070 = sand.u32 %s69, 1
        %s1071 = scalar_lea.sflag [#allocation16], %s1070
        %s1072 = sand.u32 %s229, 1
        %s1073 = scalar_lea.vmem [#allocation15], %s1072
        // Predicated region
        $region129: #{tpu_custom_call.1} parent=107 // pred_check
          %p1074 = pneg %p242
        $region130: #{tpu_custom_call.1} parent=107 // pred_check_branch
          %1076 = sbr.rel (%p1074) target = $region132
        $region131: #{tpu_custom_call.1} parent=107 // pred_region
          %1077 = dma.done %s1071, 16
        $region132: #{tpu_custom_call.1} parent=107 // pred_fallthru
          _
        %s1078 = sand.u32 %s69, 1
        %s1079 = scalar_lea.sflag [#allocation16], %s1078
        %s1080 = sand.u32 %s257, 1
        %s1081 = scalar_lea.vmem [#allocation17], %s1080
        // Predicated region
        $region133: #{tpu_custom_call.1} parent=107 // pred_check
          %p1082 = pneg %p270
        $region134: #{tpu_custom_call.1} parent=107 // pred_check_branch
          %1084 = sbr.rel (%p1082) target = $region136
        $region135: #{tpu_custom_call.1} parent=107 // pred_region
          %1085 = dma.done %s1079, 16
        $region136: #{tpu_custom_call.1} parent=107 // pred_fallthru
          _
        %s1086 = sand.u32 %s69, 1
        %s1087 = scalar_lea.sflag [#allocation19], %s1086
        %s1088 = sand.u32 %s285, 1
        %s1089 = smul.addr %s1088, 32
        %s1090 = scalar_lea.vmem [#allocation18], %s1089
        // Predicated region
        $region137: #{tpu_custom_call.1} parent=107 // pred_check
          %p1091 = pneg %p298
        $region138: #{tpu_custom_call.1} parent=107 // pred_check_branch
          %1093 = sbr.rel (%p1091) target = $region140
        $region139: #{tpu_custom_call.1} parent=107 // pred_region
          %1094 = dma.done %s1087, 512
        $region140: #{tpu_custom_call.1} parent=107 // pred_fallthru
          _
        %s1095 = sand.u32 %s69, 1
        %s1096 = scalar_lea.sflag [#allocation19], %s1095
        %s1097 = sand.u32 %s313, 1
        %s1098 = scalar_lea.vmem [#allocation20], %s1097
        // Predicated region
        $region141: #{tpu_custom_call.1} parent=107 // pred_check
          %p1099 = pneg %p326
        $region142: #{tpu_custom_call.1} parent=107 // pred_check_branch
          %1101 = sbr.rel (%p1099) target = $region144
        $region143: #{tpu_custom_call.1} parent=107 // pred_region
          %1102 = dma.done %s1096, 16
        $region144: #{tpu_custom_call.1} parent=107 // pred_fallthru
          _
        // Predicated region
        $region145: #{tpu_custom_call.1} parent=107 // pred_check
          %p1103 = pneg %p347
        $region146: #{tpu_custom_call.1} parent=107 // pred_check_branch
          %1105 = sbr.rel (%p1103) target = $region148
        $region147: #{tpu_custom_call.1} parent=107 // pred_region
          %1106 = dma.done [#allocation22], 512
        $region148: #{tpu_custom_call.1} parent=107 // pred_fallthru
          _
        // Predicated region
        $region149: #{tpu_custom_call.1} parent=107 // pred_check
          %p1107 = pneg %p368
        $region150: #{tpu_custom_call.1} parent=107 // pred_check_branch
          %1109 = sbr.rel (%p1107) target = $region152
        $region151: #{tpu_custom_call.1} parent=107 // pred_region
          %1110 = dma.done [#allocation22], 128
        $region152: #{tpu_custom_call.1} parent=107 // pred_fallthru
          _
        // Predicated region
        $region153: #{tpu_custom_call.1} parent=107 // pred_check
          %p1111 = pneg %p389
        $region154: #{tpu_custom_call.1} parent=107 // pred_check_branch
          %1113 = sbr.rel (%p1111) target = $region156
        $region155: #{tpu_custom_call.1} parent=107 // pred_region
          %1114 = dma.done [#allocation25], 16
        $region156: #{tpu_custom_call.1} parent=107 // pred_fallthru
          _
        // Predicated region
        $region157: #{tpu_custom_call.1} parent=107 // pred_check
          %p1115 = pneg %p410
        $region158: #{tpu_custom_call.1} parent=107 // pred_check_branch
          %1117 = sbr.rel (%p1115) target = $region160
        $region159: #{tpu_custom_call.1} parent=107 // pred_region
          %1118 = dma.done [#allocation25], 16
        $region160: #{tpu_custom_call.1} parent=107 // pred_fallthru
          _
        // Predicated region
        $region161: #{tpu_custom_call.1} parent=107 // pred_check
          %p1119 = pneg %p431
        $region162: #{tpu_custom_call.1} parent=107 // pred_check_branch
          %1121 = sbr.rel (%p1119) target = $region164
        $region163: #{tpu_custom_call.1} parent=107 // pred_region
          %1122 = dma.done [#allocation28], 16
        $region164: #{tpu_custom_call.1} parent=107 // pred_fallthru
          _
        // Predicated region
        $region165: #{tpu_custom_call.1} parent=107 // pred_check
          %p1123 = pneg %p452
        $region166: #{tpu_custom_call.1} parent=107 // pred_check_branch
          %1125 = sbr.rel (%p1123) target = $region168
        $region167: #{tpu_custom_call.1} parent=107 // pred_region
          %1126 = dma.done [#allocation28], 512
        $region168: #{tpu_custom_call.1} parent=107 // pred_fallthru
          _
        // Predicated region
        $region169: #{tpu_custom_call.1} parent=107 // pred_check
          %p1127 = pneg %p473
        $region170: #{tpu_custom_call.1} parent=107 // pred_check_branch
          %1129 = sbr.rel (%p1127) target = $region172
        $region171: #{tpu_custom_call.1} parent=107 // pred_region
          %1130 = dma.done [#allocation31], 16
        $region172: #{tpu_custom_call.1} parent=107 // pred_fallthru
          _
        // Predicated region
        $region173: #{tpu_custom_call.1} parent=107 // pred_check
          %p1131 = pneg %p494
        $region174: #{tpu_custom_call.1} parent=107 // pred_check_branch
          %1133 = sbr.rel (%p1131) target = $region176
        $region175: #{tpu_custom_call.1} parent=107 // pred_region
          %1134 = dma.done [#allocation31], 16
        $region176: #{tpu_custom_call.1} parent=107 // pred_fallthru
          _
        // Predicated region
        $region177: #{tpu_custom_call.1} parent=107 // pred_check
          %p1135 = pneg %p515
        $region178: #{tpu_custom_call.1} parent=107 // pred_check_branch
          %1137 = sbr.rel (%p1135) target = $region180
        $region179: #{tpu_custom_call.1} parent=107 // pred_region
          %1138 = dma.done [#allocation34], 16
        $region180: #{tpu_custom_call.1} parent=107 // pred_fallthru
          _
        // Predicated region
        $region181: #{tpu_custom_call.1} parent=107 // pred_check
          %p1139 = pneg %p536
        $region182: #{tpu_custom_call.1} parent=107 // pred_check_branch
          %1141 = sbr.rel (%p1139) target = $region184
        $region183: #{tpu_custom_call.1} parent=107 // pred_region
          %1142 = dma.done [#allocation34], 512
        $region184: #{tpu_custom_call.1} parent=107 // pred_fallthru
          _
        // Predicated region
        $region185: #{tpu_custom_call.1} parent=107 // pred_check
          %p1143 = pneg %p557
        $region186: #{tpu_custom_call.1} parent=107 // pred_check_branch
          %1145 = sbr.rel (%p1143) target = $region188
        $region187: #{tpu_custom_call.1} parent=107 // pred_region
          %1146 = dma.done [#allocation37], 16
        $region188: #{tpu_custom_call.1} parent=107 // pred_fallthru
          _
        // Predicated region
        $region189: #{tpu_custom_call.1} parent=107 // pred_check
          %p1147 = pneg %p578
        $region190: #{tpu_custom_call.1} parent=107 // pred_check_branch
          %1149 = sbr.rel (%p1147) target = $region192
        $region191: #{tpu_custom_call.1} parent=107 // pred_region
          %1150 = dma.done [#allocation37], 512
        $region192: #{tpu_custom_call.1} parent=107 // pred_fallthru
          _
        // Predicated region
        $region193: #{tpu_custom_call.1} parent=107 // pred_check
          %p1151 = pneg %p599
        $region194: #{tpu_custom_call.1} parent=107 // pred_check_branch
          %1153 = sbr.rel (%p1151) target = $region196
        $region195: #{tpu_custom_call.1} parent=107 // pred_region
          %1154 = dma.done [#allocation40], 16
        $region196: #{tpu_custom_call.1} parent=107 // pred_fallthru
          _
        %s1155 = sand.u32 %s91, 1
        %s1156 = scalar_lea.sflag [#allocation7], %s1155
        %s1157 = sand.u32 %s91, 1
        %s1158 = smul.addr %s1157, 8
        %s1159 = scalar_lea.vmem [#allocation6], %s1158
        %p1160 = pneg %p104
        %p1161 = pneg %p101
        %s1162 = sand.u32 %s69, 1
        %s1163 = scalar_lea.sflag [#allocation10], %s1162
        %s1164 = sand.u32 %s119, 1
        %s1165 = smul.addr %s1164, 8
        %s1166 = scalar_lea.vmem [#allocation9], %s1165
        %p1167 = pneg %p132
        %p1168 = pneg %p129
        %s1169 = sand.u32 %s69, 1
        %s1170 = scalar_lea.sflag [#allocation10], %s1169
        %s1171 = sand.u32 %s145, 1
        %s1172 = scalar_lea.vmem [#allocation11], %s1171
        %p1173 = pneg %p158
        %p1174 = pneg %p155
        %s1175 = sand.u32 %s69, 1
        %s1176 = scalar_lea.sflag [#allocation13], %s1175
        %s1177 = sand.u32 %s173, 1
        %s1178 = smul.addr %s1177, 32
        %s1179 = scalar_lea.vmem [#allocation12], %s1178
        %p1180 = pneg %p186
        %p1181 = pneg %p183
        %s1182 = sand.u32 %s69, 1
        %s1183 = scalar_lea.sflag [#allocation13], %s1182
        %s1184 = sand.u32 %s201, 1
        %s1185 = scalar_lea.vmem [#allocation14], %s1184
        %p1186 = pneg %p214
        %p1187 = pneg %p211
        %s1188 = sand.u32 %s69, 1
        %s1189 = scalar_lea.sflag [#allocation16], %s1188
        %s1190 = sand.u32 %s229, 1
        %s1191 = scalar_lea.vmem [#allocation15], %s1190
        %p1192 = pneg %p242
        %p1193 = pneg %p239
        %s1194 = sand.u32 %s69, 1
        %s1195 = scalar_lea.sflag [#allocation16], %s1194
        %s1196 = sand.u32 %s257, 1
        %s1197 = scalar_lea.vmem [#allocation17], %s1196
        %p1198 = pneg %p270
        %p1199 = pneg %p267
        %s1200 = sand.u32 %s69, 1
        %s1201 = scalar_lea.sflag [#allocation19], %s1200
        %s1202 = sand.u32 %s285, 1
        %s1203 = smul.addr %s1202, 32
        %s1204 = scalar_lea.vmem [#allocation18], %s1203
        %p1205 = pneg %p298
        %p1206 = pneg %p295
        %s1207 = sand.u32 %s69, 1
        %s1208 = scalar_lea.sflag [#allocation19], %s1207
        %s1209 = sand.u32 %s313, 1
        %s1210 = scalar_lea.vmem [#allocation20], %s1209
        %p1211 = pneg %p326
        %p1212 = pneg %p323
        %p1213 = pneg %p347
        %p1214 = pneg %p344
        %p1215 = pneg %p368
        %p1216 = pneg %p365
        %p1217 = pneg %p389
        %p1218 = pneg %p386
        %p1219 = pneg %p410
        %p1220 = pneg %p407
        %p1221 = pneg %p431
        %p1222 = pneg %p428
        %p1223 = pneg %p452
        %p1224 = pneg %p449
        %p1225 = pneg %p473
        %p1226 = pneg %p470
        %p1227 = pneg %p494
        %p1228 = pneg %p491
        %p1229 = pneg %p515
        %p1230 = pneg %p512
        %p1231 = pneg %p536
        %p1232 = pneg %p533
        %p1233 = pneg %p557
        %p1234 = pneg %p554
        %p1235 = pneg %p578
        %p1236 = pneg %p575
        %p1237 = pneg %p599
        %p1238 = pneg %p596
        %p1239 = pneg %p625
        %p1240 = pneg %p622
        %s1241 = sand.u32 %s612, 1
        %s1242 = scalar_lea.sflag [#allocation8], %s1241
        %s1243 = sand.u32 %s612, 1
        %s1244 = scalar_lea.vmem [#allocation41], %s1243
        %p1245 = pneg %p651
        %p1246 = pneg %p648
        %s1247 = sand.u32 %s69, 1
        %s1248 = scalar_lea.sflag [#allocation43], %s1247
        %s1249 = sand.u32 %s638, 1
        %s1250 = scalar_lea.vmem [#allocation42], %s1249
        %p1251 = pneg %p677
        %p1252 = pneg %p674
        %s1253 = sand.u32 %s69, 1
        %s1254 = scalar_lea.sflag [#allocation43], %s1253
        %s1255 = sand.u32 %s664, 1
        %s1256 = scalar_lea.vmem [#allocation44], %s1255
        %s1257 = sld [smem:[#allocation5 + %s73]]
        %s1258 = sld [smem:[#allocation5 + %s73]]
        %s1259 = sld [smem:[#allocation5 + %s73]]
        %s1260 = sld [smem:[#allocation5 + %s73]]
        %s1261 = sld [smem:[#allocation5 + %s73]]
        %s1262 = sld [smem:[#allocation5 + %s73]]
        %p1263 = scmp.eq.s32.totalorder %s74, 0
        // Predicated region
        $region197: #{tpu_custom_call.1} parent=107 // pred_check
          %p1264 = pneg %p1263
        $region198: #{tpu_custom_call.1} parent=107 // pred_check_branch
          %1266 = sbr.rel (%p1264) target = $region200
        $region199: #{tpu_custom_call.1} parent=107 // pred_region
          %vm1267 = vcmask 253952
          %1268 = vst.msk [vmem:[#allocation2] sm:$0x1] %vm1267, 0.0
          %vm1269 = vcmask 0
          %1270 = vst.msk [vmem:[#allocation3] sm:$0x1] %vm1269, 0.0
        $region200: #{tpu_custom_call.1} parent=107 // pred_fallthru
          _
        %v1271 = vld [vmem:[%s1031] sm:$0xff]
        %v1272 = vld [vmem:[%s1057] sm:$0xff]
        %v1273 = vld [vmem:[%s1057 + $0x8] sm:$0xff]
        %v1274 = vld [vmem:[%s1057 + $0x10] sm:$0xff]
        %v1275 = vld [vmem:[%s1057 + $0x18] sm:$0xff]
        %v1276 = vld [vmem:[%s1065] sm:$0x1]
        %v1278 = vlaneseq
        %v1279 = vshrl.u32 %v1278, 7
        %v1280 = vsub.s32 0, %v1279
        %v1281 = vrot.slane %v1276, %v1280
        %vm1283 = vcmask 261120
        %v1285 = vsel %vm1283, %v1271, 0
        %1287 = vmatprep.subr.mxu0 0.0
        %1288 = vmatpush1.msra.mxu0 %v1272
        %1289 = vmatprep.subr.mxu0 0.0
        %1290 = vmatpush1.msra.mxu0 %v1273
        %1291 = vmatprep.subr.mxu0 0.0
        %1292 = vmatpush1.msra.mxu0 %v1274
        %1293 = vmatprep.subr.mxu0 0.0
        %1294 = vmatpush1.msra.mxu0 %v1275
        %1295 = vmatprep.subr.mxu0 0.0
        %1296 = vmatpush1.msra.mxu0 0.0
        %1297 = vmatprep.subr.mxu0 0.0
        %1298 = vmatpush1.msra.mxu0 0.0
        %1299 = vmatprep.subr.mxu0 0.0
        %1300 = vmatpush1.msra.mxu0 0.0
        %1301 = vmatprep.subr.mxu0 0.0
        %1302 = vmatpush1.msra.mxu0 0.0
        %1303 = vmatprep.subr.mxu0 0.0
        %1304 = vmatpush1.msra.mxu0 0.0
        %1305 = vmatprep.subr.mxu0 0.0
        %1306 = vmatpush1.msra.mxu0 0.0
        %1307 = vmatprep.subr.mxu0 0.0
        %1308 = vmatpush1.msra.mxu0 0.0
        %1309 = vmatprep.subr.mxu0 0.0
        %1310 = vmatpush1.msra.mxu0 0.0
        %1311 = vmatprep.subr.mxu0 0.0
        %1312 = vmatpush1.msra.mxu0 0.0
        %1313 = vmatprep.subr.mxu0 0.0
        %1314 = vmatpush1.msra.mxu0 0.0
        %1315 = vmatprep.subr.mxu0 0.0
        %1316 = vmatpush1.msra.mxu0 0.0
        %1317 = vmatprep.subr.mxu0 0.0
        %1318 = vmatpush1.msra.mxu0 0.0
        %1319 = vmatprep.subr.mxu0 0.0
        %1320 = vmatpush1.msra.mxu0 0.0
        %1321 = vmatprep.subr.mxu0 0.0
        %1322 = vmatpush1.msra.mxu0 0.0
        %1323 = vmatprep.subr.mxu0 0.0
        %1324 = vmatpush1.msra.mxu0 0.0
        %1325 = vmatprep.subr.mxu0 0.0
        %1326 = vmatpush1.msra.mxu0 0.0
        %1327 = vmatprep.subr.mxu0 0.0
        %1328 = vmatpush1.msra.mxu0 0.0
        %1329 = vmatprep.subr.mxu0 0.0
        %1330 = vmatpush1.msra.mxu0 0.0
        %1331 = vmatprep.subr.mxu0 0.0
        %1332 = vmatpush1.msra.mxu0 0.0
        %1333 = vmatprep.subr.mxu0 0.0
        %1334 = vmatpush1.msra.mxu0 0.0
        %1335 = vmatprep.subr.mxu0 0.0
        %1336 = vmatpush1.msra.mxu0 0.0
        %1337 = vmatprep.subr.mxu0 0.0
        %1338 = vmatpush1.msra.mxu0 0.0
        %1339 = vmatprep.subr.mxu0 0.0
        %1340 = vmatpush1.msra.mxu0 0.0
        %1341 = vmatprep.subr.mxu0 0.0
        %1342 = vmatpush1.msra.mxu0 0.0
        %1343 = vmatprep.subr.mxu0 0.0
        %1344 = vmatpush1.msra.mxu0 0.0
        %1345 = vmatprep.subr.mxu0 0.0
        %1346 = vmatpush1.msra.mxu0 0.0
        %1347 = vmatprep.subr.mxu0 0.0
        %1348 = vmatpush1.msra.mxu0 0.0
        %1349 = vmatprep.subr.mxu0 0.0
        %1350 = vmatpush1.msra.mxu0 0.0
        %1351 = vmatprep.mubr.f32.mxu0 0.0
        %1352 = vmatmul.mubr.f32.gmra.mrb[0].mxu0 %v1285
        %v1353 = vpop.f32.mrb[0].mxu0
        %v1354 = vadd.f32 %v1281, %v1353
        %v1355 = vpop.f32.mrb[0].mxu0
        %1356 = vdwg.mxu0
        %v1357 = vld [vmem:[%s1073] sm:$0x1]
        %v1358 = vld [vmem:[%s1081] sm:$0x1]
        %v1359 = vsel %vm1283, %v1354, 0.0
        %1360 = vadd.xlane.f32.xlu0 %v1359
        %v1361 = vpop.xlane.xlu0 %1360
        %v1362 = vrcp.pop 32.0
        %v1363 = vmul.f32 %v1361, %v1362
        %v1364 = vsub.f32 %v1354, %v1363
        %v1365 = vmul.f32 %v1364, %v1364
        %v1366 = vsel %vm1283, %v1365, 0.0
        %1367 = vadd.xlane.f32.xlu0 %v1366
        %v1368 = vpop.xlane.xlu0 %1367
        %v1369 = vmul.f32 %v1368, %v1362
        %v1370 = vadd.f32 %v1369, 1e-05
        %v1371 = vrsqrt.pop %v1370
        %v1372 = vmul.f32 %v1364, %v1371
        %v1374 = vlaneseq
        %v1375 = vshrl.u32 %v1374, 7
        %v1376 = vsub.s32 0, %v1375
        %v1377 = vrot.slane %v1357, %v1376
        %v1379 = vmul.f32 %v1372, %v1377
        %v1381 = vlaneseq
        %v1382 = vshrl.u32 %v1381, 7
        %v1383 = vsub.s32 0, %v1382
        %v1384 = vrot.slane %v1358, %v1383
        %v1386 = vadd.f32 %v1379, %v1384
        %v1387 = vmax.f32 %v1386, 0.0
        %v1388 = vld [vmem:[%s1090] sm:$0xff]
        %v1389 = vld [vmem:[%s1090 + $0x8] sm:$0xff]
        %v1390 = vld [vmem:[%s1090 + $0x10] sm:$0xff]
        %v1391 = vld [vmem:[%s1090 + $0x18] sm:$0xff]
        %v1392 = vld [vmem:[%s1098] sm:$0x1]
        %v1394 = vlaneseq
        %v1395 = vshrl.u32 %v1394, 7
        %v1396 = vsub.s32 0, %v1395
        %v1397 = vrot.slane %v1392, %v1396
        %v1400 = vsel %vm1283, %v1387, 0
        %1402 = vmatprep.subr.mxu0 0.0
        %1403 = vmatpush1.msra.mxu0 %v1388
        %1404 = vmatprep.subr.mxu0 0.0
        %1405 = vmatpush1.msra.mxu0 %v1389
        %1406 = vmatprep.subr.mxu0 0.0
        %1407 = vmatpush1.msra.mxu0 %v1390
        %1408 = vmatprep.subr.mxu0 0.0
        %1409 = vmatpush1.msra.mxu0 %v1391
        %1410 = vmatprep.subr.mxu0 0.0
        %1411 = vmatpush1.msra.mxu0 0.0
        %1412 = vmatprep.subr.mxu0 0.0
        %1413 = vmatpush1.msra.mxu0 0.0
        %1414 = vmatprep.subr.mxu0 0.0
        %1415 = vmatpush1.msra.mxu0 0.0
        %1416 = vmatprep.subr.mxu0 0.0
        %1417 = vmatpush1.msra.mxu0 0.0
        %1418 = vmatprep.subr.mxu0 0.0
        %1419 = vmatpush1.msra.mxu0 0.0
        %1420 = vmatprep.subr.mxu0 0.0
        %1421 = vmatpush1.msra.mxu0 0.0
        %1422 = vmatprep.subr.mxu0 0.0
        %1423 = vmatpush1.msra.mxu0 0.0
        %1424 = vmatprep.subr.mxu0 0.0
        %1425 = vmatpush1.msra.mxu0 0.0
        %1426 = vmatprep.subr.mxu0 0.0
        %1427 = vmatpush1.msra.mxu0 0.0
        %1428 = vmatprep.subr.mxu0 0.0
        %1429 = vmatpush1.msra.mxu0 0.0
        %1430 = vmatprep.subr.mxu0 0.0
        %1431 = vmatpush1.msra.mxu0 0.0
        %1432 = vmatprep.subr.mxu0 0.0
        %1433 = vmatpush1.msra.mxu0 0.0
        %1434 = vmatprep.subr.mxu0 0.0
        %1435 = vmatpush1.msra.mxu0 0.0
        %1436 = vmatprep.subr.mxu0 0.0
        %1437 = vmatpush1.msra.mxu0 0.0
        %1438 = vmatprep.subr.mxu0 0.0
        %1439 = vmatpush1.msra.mxu0 0.0
        %1440 = vmatprep.subr.mxu0 0.0
        %1441 = vmatpush1.msra.mxu0 0.0
        %1442 = vmatprep.subr.mxu0 0.0
        %1443 = vmatpush1.msra.mxu0 0.0
        %1444 = vmatprep.subr.mxu0 0.0
        %1445 = vmatpush1.msra.mxu0 0.0
        %1446 = vmatprep.subr.mxu0 0.0
        %1447 = vmatpush1.msra.mxu0 0.0
        %1448 = vmatprep.subr.mxu0 0.0
        %1449 = vmatpush1.msra.mxu0 0.0
        %1450 = vmatprep.subr.mxu0 0.0
        %1451 = vmatpush1.msra.mxu0 0.0
        %1452 = vmatprep.subr.mxu0 0.0
        %1453 = vmatpush1.msra.mxu0 0.0
        %1454 = vmatprep.subr.mxu0 0.0
        %1455 = vmatpush1.msra.mxu0 0.0
        %1456 = vmatprep.subr.mxu0 0.0
        %1457 = vmatpush1.msra.mxu0 0.0
        %1458 = vmatprep.subr.mxu0 0.0
        %1459 = vmatpush1.msra.mxu0 0.0
        %1460 = vmatprep.subr.mxu0 0.0
        %1461 = vmatpush1.msra.mxu0 0.0
        %1462 = vmatprep.subr.mxu0 0.0
        %1463 = vmatpush1.msra.mxu0 0.0
        %1464 = vmatprep.subr.mxu0 0.0
        %1465 = vmatpush1.msra.mxu0 0.0
        %1466 = vmatprep.mubr.f32.mxu0 0.0
        %1467 = vmatmul.mubr.f32.gmra.mrb[0].mxu0 %v1400
        %v1468 = vpop.f32.mrb[0].mxu0
        %v1469 = vadd.f32 %v1397, %v1468
        %v1470 = vpop.f32.mrb[0].mxu0
        %1471 = vdwg.mxu0
        %v1472 = vld [vmem:[%s1040] sm:$0xff]
        %1473 = vxpose.xlu0.b32.start [1/16] %v1472, 128
        %1474 = vxpose.xlu0.b32.cont [2/16] 0.0, 128
        %1475 = vxpose.xlu0.b32.cont [3/16] 0.0, 128
        %1476 = vxpose.xlu0.b32.cont [4/16] 0.0, 128
        %1477 = vxpose.xlu0.b32.cont [5/16] 0.0, 128
        %1478 = vxpose.xlu0.b32.cont [6/16] 0.0, 128
        %1479 = vxpose.xlu0.b32.cont [7/16] 0.0, 128
        %1480 = vxpose.xlu0.b32.cont [8/16] 0.0, 128
        %1481 = vxpose.xlu0.b32.cont [9/16] 0.0, 128
        %1482 = vxpose.xlu0.b32.cont [10/16] 0.0, 128
        %1483 = vxpose.xlu0.b32.cont [11/16] 0.0, 128
        %1484 = vxpose.xlu0.b32.cont [12/16] 0.0, 128
        %1485 = vxpose.xlu0.b32.cont [13/16] 0.0, 128
        %1486 = vxpose.xlu0.b32.cont [14/16] 0.0, 128
        %1487 = vxpose.xlu0.b32.cont [15/16] 0.0, 128
        %1488 = vxpose.xlu0.b32.end [16/16] 0.0, 128
        %v1489 = vpop.trf.xlu0
        %v1490 = vpop.trf.xlu0
        %v1491 = vpop.trf.xlu0
        %v1492 = vpop.trf.xlu0
        %v1493 = vpop.trf.xlu0
        %v1494 = vpop.trf.xlu0
        %v1495 = vpop.trf.xlu0
        %v1496 = vpop.trf.xlu0
        %v1497 = vpop.trf.xlu0
        %v1498 = vpop.trf.xlu0
        %v1499 = vpop.trf.xlu0
        %v1500 = vpop.trf.xlu0
        %v1501 = vpop.trf.xlu0
        %v1502 = vpop.trf.xlu0
        %v1503 = vpop.trf.xlu0
        %v1504 = vpop.trf.xlu0
        %vm1505 = vcmask 64512
        %v1507 = vsel %vm1505, %v1489, 0
        %1509 = vmatprep.subr.mxu0 0.0
        %1510 = vmatpush1.msra.mxu0 %v1469
        %1511 = vmatprep.subr.mxu0 0.0
        %1512 = vmatpush1.msra.mxu0 0.0
        %1513 = vmatprep.subr.mxu0 0.0
        %1514 = vmatpush1.msra.mxu0 0.0
        %1515 = vmatprep.subr.mxu0 0.0
        %1516 = vmatpush1.msra.mxu0 0.0
        %1517 = vmatprep.subr.mxu0 0.0
        %1518 = vmatpush1.msra.mxu0 0.0
        %1519 = vmatprep.subr.mxu0 0.0
        %1520 = vmatpush1.msra.mxu0 0.0
        %1521 = vmatprep.subr.mxu0 0.0
        %1522 = vmatpush1.msra.mxu0 0.0
        %1523 = vmatprep.subr.mxu0 0.0
        %1524 = vmatpush1.msra.mxu0 0.0
        %1525 = vmatprep.subr.mxu0 0.0
        %1526 = vmatpush1.msra.mxu0 0.0
        %1527 = vmatprep.subr.mxu0 0.0
        %1528 = vmatpush1.msra.mxu0 0.0
        %1529 = vmatprep.subr.mxu0 0.0
        %1530 = vmatpush1.msra.mxu0 0.0
        %1531 = vmatprep.subr.mxu0 0.0
        %1532 = vmatpush1.msra.mxu0 0.0
        %1533 = vmatprep.subr.mxu0 0.0
        %1534 = vmatpush1.msra.mxu0 0.0
        %1535 = vmatprep.subr.mxu0 0.0
        %1536 = vmatpush1.msra.mxu0 0.0
        %1537 = vmatprep.subr.mxu0 0.0
        %1538 = vmatpush1.msra.mxu0 0.0
        %1539 = vmatprep.subr.mxu0 0.0
        %1540 = vmatpush1.msra.mxu0 0.0
        %1541 = vmatprep.subr.mxu0 0.0
        %1542 = vmatpush1.msra.mxu0 0.0
        %1543 = vmatprep.subr.mxu0 0.0
        %1544 = vmatpush1.msra.mxu0 0.0
        %1545 = vmatprep.subr.mxu0 0.0
        %1546 = vmatpush1.msra.mxu0 0.0
        %1547 = vmatprep.subr.mxu0 0.0
        %1548 = vmatpush1.msra.mxu0 0.0
        %1549 = vmatprep.subr.mxu0 0.0
        %1550 = vmatpush1.msra.mxu0 0.0
        %1551 = vmatprep.subr.mxu0 0.0
        %1552 = vmatpush1.msra.mxu0 0.0
        %1553 = vmatprep.subr.mxu0 0.0
        %1554 = vmatpush1.msra.mxu0 0.0
        %1555 = vmatprep.subr.mxu0 0.0
        %1556 = vmatpush1.msra.mxu0 0.0
        %1557 = vmatprep.subr.mxu0 0.0
        %1558 = vmatpush1.msra.mxu0 0.0
        %1559 = vmatprep.subr.mxu0 0.0
        %1560 = vmatpush1.msra.mxu0 0.0
        %1561 = vmatprep.subr.mxu0 0.0
        %1562 = vmatpush1.msra.mxu0 0.0
        %1563 = vmatprep.subr.mxu0 0.0
        %1564 = vmatpush1.msra.mxu0 0.0
        %1565 = vmatprep.subr.mxu0 0.0
        %1566 = vmatpush1.msra.mxu0 0.0
        %1567 = vmatprep.subr.mxu0 0.0
        %1568 = vmatpush1.msra.mxu0 0.0
        %1569 = vmatprep.subr.mxu0 0.0
        %1570 = vmatpush1.msra.mxu0 0.0
        %1571 = vmatprep.subr.mxu0 0.0
        %1572 = vmatpush1.msra.mxu0 0.0
        %1573 = vmatprep.mubr.f32.mxu0 0.0
        %1574 = vmatmul.mubr.f32.gmra.mrb[0].mxu0 %v1507
        %v1575 = vpop.f32.mrb[0].mxu0
        %v1576 = vadd.f32 0.0, %v1575
        %v1577 = vpop.f32.mrb[0].mxu0
        %1578 = vdwg.mxu0
        %v1579 = vld [vmem:[#allocation2] sm:$0x1]
        %v1580 = vadd.f32 %v1579, %v1576
        %vm1581 = vcmask 253952
        %1582 = vst.msk [vmem:[#allocation2] sm:$0x1] %vm1581, %v1580
        %v1583 = vld [vmem:[#allocation3] sm:$0x1]
        %vm1584 = vcmask 7168
        %v1585 = vsel %vm1584, %v1472, 0.0
        %1586 = vadd.xlane.f32.xlu0 %v1585
        %v1587 = vpop.xlane.xlu0 %1586
        %v1588 = vrot.slane %v1587, 4
        %v1589 = vadd.f32 %v1587, %v1588
        %v1590 = vrot.slane %v1589, 2
        %v1591 = vadd.f32 %v1589, %v1590
        %v1592 = vrot.slane %v1591, 1
        %v1593 = vadd.f32 %v1591, %v1592
        %s1594 = vtos %v1593
        %v1595 = vstv %s1594
        %v1596 = vadd.f32 %v1583, %v1595
        %vm1597 = vcmask 0
        %1598 = vst.msk [vmem:[#allocation3] sm:$0x1] %vm1597, %v1596
        %p1599 = scmp.eq.s32.totalorder %s74, 1
        // Predicated region
        $region201: #{tpu_custom_call.1} parent=107 // pred_check
          %p1600 = pneg %p1599
        $region202: #{tpu_custom_call.1} parent=107 // pred_check_branch
          %1602 = sbr.rel (%p1600) target = $region204
        $region203: #{tpu_custom_call.1} parent=107 // pred_region
          %v1603 = vld [vmem:[#allocation3] sm:$0x1]
          %v1604 = vmax.f32 %v1603, 1e-06
          %v1605 = vld [vmem:[#allocation2] sm:$0x1]
          %1607 = vset.pattern.permute.xlu0 0
          %1608 = vperm.xlu0 %1607, %v1604
          %v1609 = vpop.permute.xlu0 %1608
          %v1611 = vlaneseq
          %v1612 = vshrl.u32 %v1611, 7
          %v1613 = vsub.s32 0, %v1612
          %v1614 = vrot.slane %v1609, %v1613
          %v1615 = vrcp.pop %v1614
          %v1616 = vmul.f32 %v1605, %v1615
          %v1617 = vld [vmem:[%s1048] sm:$0x1]
          %v1618 = vld [vmem:[#allocation21] sm:$0xff]
          %v1619 = vld [vmem:[#allocation21 + $0x8] sm:$0xff]
          %v1620 = vld [vmem:[#allocation21 + $0x10] sm:$0xff]
          %v1621 = vld [vmem:[#allocation21 + $0x18] sm:$0xff]
          %v1622 = vld [vmem:[#allocation23] sm:$0xff]
          %v1624 = vsel %vm1505, %v1617, 0
          %1626 = vmatprep.subr.mxu0 0.0
          %1627 = vmatpush1.msra.mxu0 %v1622
          %1628 = vmatprep.subr.mxu0 0.0
          %1629 = vmatpush1.msra.mxu0 0.0
          %1630 = vmatprep.subr.mxu0 0.0
          %1631 = vmatpush1.msra.mxu0 0.0
          %1632 = vmatprep.subr.mxu0 0.0
          %1633 = vmatpush1.msra.mxu0 0.0
          %1634 = vmatprep.subr.mxu0 0.0
          %1635 = vmatpush1.msra.mxu0 0.0
          %1636 = vmatprep.subr.mxu0 0.0
          %1637 = vmatpush1.msra.mxu0 0.0
          %1638 = vmatprep.subr.mxu0 0.0
          %1639 = vmatpush1.msra.mxu0 0.0
          %1640 = vmatprep.subr.mxu0 0.0
          %1641 = vmatpush1.msra.mxu0 0.0
          %1642 = vmatprep.subr.mxu0 0.0
          %1643 = vmatpush1.msra.mxu0 0.0
          %1644 = vmatprep.subr.mxu0 0.0
          %1645 = vmatpush1.msra.mxu0 0.0
          %1646 = vmatprep.subr.mxu0 0.0
          %1647 = vmatpush1.msra.mxu0 0.0
          %1648 = vmatprep.subr.mxu0 0.0
          %1649 = vmatpush1.msra.mxu0 0.0
          %1650 = vmatprep.subr.mxu0 0.0
          %1651 = vmatpush1.msra.mxu0 0.0
          %1652 = vmatprep.subr.mxu0 0.0
          %1653 = vmatpush1.msra.mxu0 0.0
          %1654 = vmatprep.subr.mxu0 0.0
          %1655 = vmatpush1.msra.mxu0 0.0
          %1656 = vmatprep.subr.mxu0 0.0
          %1657 = vmatpush1.msra.mxu0 0.0
          %1658 = vmatprep.subr.mxu0 0.0
          %1659 = vmatpush1.msra.mxu0 0.0
          %1660 = vmatprep.subr.mxu0 0.0
          %1661 = vmatpush1.msra.mxu0 0.0
          %1662 = vmatprep.subr.mxu0 0.0
          %1663 = vmatpush1.msra.mxu0 0.0
          %1664 = vmatprep.subr.mxu0 0.0
          %1665 = vmatpush1.msra.mxu0 0.0
          %1666 = vmatprep.subr.mxu0 0.0
          %1667 = vmatpush1.msra.mxu0 0.0
          %1668 = vmatprep.subr.mxu0 0.0
          %1669 = vmatpush1.msra.mxu0 0.0
          %1670 = vmatprep.subr.mxu0 0.0
          %1671 = vmatpush1.msra.mxu0 0.0
          %1672 = vmatprep.subr.mxu0 0.0
          %1673 = vmatpush1.msra.mxu0 0.0
          %1674 = vmatprep.subr.mxu0 0.0
          %1675 = vmatpush1.msra.mxu0 0.0
          %1676 = vmatprep.subr.mxu0 0.0
          %1677 = vmatpush1.msra.mxu0 0.0
          %1678 = vmatprep.subr.mxu0 0.0
          %1679 = vmatpush1.msra.mxu0 0.0
          %1680 = vmatprep.subr.mxu0 0.0
          %1681 = vmatpush1.msra.mxu0 0.0
          %1682 = vmatprep.subr.mxu0 0.0
          %1683 = vmatpush1.msra.mxu0 0.0
          %1684 = vmatprep.subr.mxu0 0.0
          %1685 = vmatpush1.msra.mxu0 0.0
          %1686 = vmatprep.subr.mxu0 0.0
          %1687 = vmatpush1.msra.mxu0 0.0
          %1688 = vmatprep.subr.mxu0 0.0
          %1689 = vmatpush1.msra.mxu0 0.0
          %1690 = vmatprep.mubr.f32.mxu0 0.0
          %1691 = vmatmul.mubr.f32.gmra.mrb[0].mxu0 %v1624
          %v1692 = vpop.f32.mrb[0].mxu0
          %v1693 = vadd.f32 0.0, %v1692
          %v1694 = vpop.f32.mrb[0].mxu0
          %1695 = vdwg.mxu0
          %v1697 = vsel %vm1283, %v1616, 0
          %1699 = vmatprep.subr.mxu0 0.0
          %1700 = vmatpush1.msra.mxu0 %v1618
          %1701 = vmatprep.subr.mxu0 0.0
          %1702 = vmatpush1.msra.mxu0 %v1619
          %1703 = vmatprep.subr.mxu0 0.0
          %1704 = vmatpush1.msra.mxu0 %v1620
          %1705 = vmatprep.subr.mxu0 0.0
          %1706 = vmatpush1.msra.mxu0 %v1621
          %1707 = vmatprep.subr.mxu0 0.0
          %1708 = vmatpush1.msra.mxu0 0.0
          %1709 = vmatprep.subr.mxu0 0.0
          %1710 = vmatpush1.msra.mxu0 0.0
          %1711 = vmatprep.subr.mxu0 0.0
          %1712 = vmatpush1.msra.mxu0 0.0
          %1713 = vmatprep.subr.mxu0 0.0
          %1714 = vmatpush1.msra.mxu0 0.0
          %1715 = vmatprep.subr.mxu0 0.0
          %1716 = vmatpush1.msra.mxu0 0.0
          %1717 = vmatprep.subr.mxu0 0.0
          %1718 = vmatpush1.msra.mxu0 0.0
          %1719 = vmatprep.subr.mxu0 0.0
          %1720 = vmatpush1.msra.mxu0 0.0
          %1721 = vmatprep.subr.mxu0 0.0
          %1722 = vmatpush1.msra.mxu0 0.0
          %1723 = vmatprep.subr.mxu0 0.0
          %1724 = vmatpush1.msra.mxu0 0.0
          %1725 = vmatprep.subr.mxu0 0.0
          %1726 = vmatpush1.msra.mxu0 0.0
          %1727 = vmatprep.subr.mxu0 0.0
          %1728 = vmatpush1.msra.mxu0 0.0
          %1729 = vmatprep.subr.mxu0 0.0
          %1730 = vmatpush1.msra.mxu0 0.0
          %1731 = vmatprep.subr.mxu0 0.0
          %1732 = vmatpush1.msra.mxu0 0.0
          %1733 = vmatprep.subr.mxu0 0.0
          %1734 = vmatpush1.msra.mxu0 0.0
          %1735 = vmatprep.subr.mxu0 0.0
          %1736 = vmatpush1.msra.mxu0 0.0
          %1737 = vmatprep.subr.mxu0 0.0
          %1738 = vmatpush1.msra.mxu0 0.0
          %1739 = vmatprep.subr.mxu0 0.0
          %1740 = vmatpush1.msra.mxu0 0.0
          %1741 = vmatprep.subr.mxu0 0.0
          %1742 = vmatpush1.msra.mxu0 0.0
          %1743 = vmatprep.subr.mxu0 0.0
          %1744 = vmatpush1.msra.mxu0 0.0
          %1745 = vmatprep.subr.mxu0 0.0
          %1746 = vmatpush1.msra.mxu0 0.0
          %1747 = vmatprep.subr.mxu0 0.0
          %1748 = vmatpush1.msra.mxu0 0.0
          %1749 = vmatprep.subr.mxu0 0.0
          %1750 = vmatpush1.msra.mxu0 0.0
          %1751 = vmatprep.subr.mxu0 0.0
          %1752 = vmatpush1.msra.mxu0 0.0
          %1753 = vmatprep.subr.mxu0 0.0
          %1754 = vmatpush1.msra.mxu0 0.0
          %1755 = vmatprep.subr.mxu0 0.0
          %1756 = vmatpush1.msra.mxu0 0.0
          %1757 = vmatprep.subr.mxu0 0.0
          %1758 = vmatpush1.msra.mxu0 0.0
          %1759 = vmatprep.subr.mxu0 0.0
          %1760 = vmatpush1.msra.mxu0 0.0
          %1761 = vmatprep.subr.mxu0 0.0
          %1762 = vmatpush1.msra.mxu0 0.0
          %1763 = vmatprep.mubr.f32.mxu0 0.0
          %1764 = vmatmul.mubr.f32.gmra.mrb[0].mxu0 %v1697
          %v1765 = vpop.f32.mrb[0].mxu0
          %v1766 = vadd.f32 %v1693, %v1765
          %v1767 = vpop.f32.mrb[0].mxu0
          %1768 = vdwg.mxu0
          %v1769 = vld [vmem:[#allocation24] sm:$0x1]
          %v1770 = vadd.f32 %v1766, %v1769
          %v1771 = vld [vmem:[#allocation26] sm:$0x1]
          %v1772 = vld [vmem:[#allocation27] sm:$0x1]
          %v1773 = vsel %vm1581, %v1770, 0.0
          %1774 = vadd.xlane.f32.xlu0 %v1773
          %v1775 = vpop.xlane.xlu0 %1774
          %v1776 = vmul.f32 %v1775, %v1362
          %v1777 = vsub.f32 %v1770, %v1776
          %v1778 = vmul.f32 %v1777, %v1777
          %v1779 = vsel %vm1581, %v1778, 0.0
          %1780 = vadd.xlane.f32.xlu0 %v1779
          %v1781 = vpop.xlane.xlu0 %1780
          %v1782 = vmul.f32 %v1781, %v1362
          %v1783 = vadd.f32 %v1782, 1e-05
          %v1784 = vrsqrt.pop %v1783
          %v1785 = vmul.f32 %v1777, %v1784
          %v1786 = vmul.f32 %v1785, %v1771
          %v1787 = vadd.f32 %v1786, %v1772
          %v1788 = vmax.f32 %v1787, 0.0
          %1789 = vst.msk [vmem:[%s1244] sm:$0x1] %vm1581, %v1788
          %v1790 = vld [vmem:[#allocation29] sm:$0xff]
          %v1791 = vld [vmem:[#allocation29 + $0x8] sm:$0xff]
          %v1792 = vld [vmem:[#allocation29 + $0x10] sm:$0xff]
          %v1793 = vld [vmem:[#allocation29 + $0x18] sm:$0xff]
          %v1794 = vld [vmem:[#allocation30] sm:$0x1]
          %v1796 = vsel %vm1283, %v1788, 0
          %1798 = vmatprep.subr.mxu0 0.0
          %1799 = vmatpush1.msra.mxu0 %v1790
          %1800 = vmatprep.subr.mxu0 0.0
          %1801 = vmatpush1.msra.mxu0 %v1791
          %1802 = vmatprep.subr.mxu0 0.0
          %1803 = vmatpush1.msra.mxu0 %v1792
          %1804 = vmatprep.subr.mxu0 0.0
          %1805 = vmatpush1.msra.mxu0 %v1793
          %1806 = vmatprep.subr.mxu0 0.0
          %1807 = vmatpush1.msra.mxu0 0.0
          %1808 = vmatprep.subr.mxu0 0.0
          %1809 = vmatpush1.msra.mxu0 0.0
          %1810 = vmatprep.subr.mxu0 0.0
          %1811 = vmatpush1.msra.mxu0 0.0
          %1812 = vmatprep.subr.mxu0 0.0
          %1813 = vmatpush1.msra.mxu0 0.0
          %1814 = vmatprep.subr.mxu0 0.0
          %1815 = vmatpush1.msra.mxu0 0.0
          %1816 = vmatprep.subr.mxu0 0.0
          %1817 = vmatpush1.msra.mxu0 0.0
          %1818 = vmatprep.subr.mxu0 0.0
          %1819 = vmatpush1.msra.mxu0 0.0
          %1820 = vmatprep.subr.mxu0 0.0
          %1821 = vmatpush1.msra.mxu0 0.0
          %1822 = vmatprep.subr.mxu0 0.0
          %1823 = vmatpush1.msra.mxu0 0.0
          %1824 = vmatprep.subr.mxu0 0.0
          %1825 = vmatpush1.msra.mxu0 0.0
          %1826 = vmatprep.subr.mxu0 0.0
          %1827 = vmatpush1.msra.mxu0 0.0
          %1828 = vmatprep.subr.mxu0 0.0
          %1829 = vmatpush1.msra.mxu0 0.0
          %1830 = vmatprep.subr.mxu0 0.0
          %1831 = vmatpush1.msra.mxu0 0.0
          %1832 = vmatprep.subr.mxu0 0.0
          %1833 = vmatpush1.msra.mxu0 0.0
          %1834 = vmatprep.subr.mxu0 0.0
          %1835 = vmatpush1.msra.mxu0 0.0
          %1836 = vmatprep.subr.mxu0 0.0
          %1837 = vmatpush1.msra.mxu0 0.0
          %1838 = vmatprep.subr.mxu0 0.0
          %1839 = vmatpush1.msra.mxu0 0.0
          %1840 = vmatprep.subr.mxu0 0.0
          %1841 = vmatpush1.msra.mxu0 0.0
          %1842 = vmatprep.subr.mxu0 0.0
          %1843 = vmatpush1.msra.mxu0 0.0
          %1844 = vmatprep.subr.mxu0 0.0
          %1845 = vmatpush1.msra.mxu0 0.0
          %1846 = vmatprep.subr.mxu0 0.0
          %1847 = vmatpush1.msra.mxu0 0.0
          %1848 = vmatprep.subr.mxu0 0.0
          %1849 = vmatpush1.msra.mxu0 0.0
          %1850 = vmatprep.subr.mxu0 0.0
          %1851 = vmatpush1.msra.mxu0 0.0
          %1852 = vmatprep.subr.mxu0 0.0
          %1853 = vmatpush1.msra.mxu0 0.0
          %1854 = vmatprep.subr.mxu0 0.0
          %1855 = vmatpush1.msra.mxu0 0.0
          %1856 = vmatprep.subr.mxu0 0.0
          %1857 = vmatpush1.msra.mxu0 0.0
          %1858 = vmatprep.subr.mxu0 0.0
          %1859 = vmatpush1.msra.mxu0 0.0
          %1860 = vmatprep.subr.mxu0 0.0
          %1861 = vmatpush1.msra.mxu0 0.0
          %1862 = vmatprep.mubr.f32.mxu0 0.0
          %1863 = vmatmul.mubr.f32.gmra.mrb[0].mxu0 %v1796
          %v1864 = vpop.f32.mrb[0].mxu0
          %v1865 = vadd.f32 %v1794, %v1864
          %v1866 = vpop.f32.mrb[0].mxu0
          %1867 = vdwg.mxu0
          %v1868 = vld [vmem:[#allocation32] sm:$0x1]
          %v1869 = vld [vmem:[#allocation33] sm:$0x1]
          %v1870 = vsel %vm1581, %v1865, 0.0
          %1871 = vadd.xlane.f32.xlu0 %v1870
          %v1872 = vpop.xlane.xlu0 %1871
          %v1873 = vmul.f32 %v1872, %v1362
          %v1874 = vsub.f32 %v1865, %v1873
          %v1875 = vmul.f32 %v1874, %v1874
          %v1876 = vsel %vm1581, %v1875, 0.0
          %1877 = vadd.xlane.f32.xlu0 %v1876
          %v1878 = vpop.xlane.xlu0 %1877
          %v1879 = vmul.f32 %v1878, %v1362
          %v1880 = vadd.f32 %v1879, 1e-05
          %v1881 = vrsqrt.pop %v1880
          %v1882 = vmul.f32 %v1874, %v1881
          %v1883 = vmul.f32 %v1882, %v1868
          %v1884 = vadd.f32 %v1883, %v1869
          %v1885 = vmax.f32 %v1884, 0.0
          %v1886 = vld [vmem:[#allocation35] sm:$0xff]
          %v1887 = vld [vmem:[#allocation35 + $0x8] sm:$0xff]
          %v1888 = vld [vmem:[#allocation35 + $0x10] sm:$0xff]
          %v1889 = vld [vmem:[#allocation35 + $0x18] sm:$0xff]
          %v1890 = vld [vmem:[#allocation36] sm:$0x1]
          %v1892 = vsel %vm1283, %v1885, 0
          %1894 = vmatprep.subr.mxu0 0.0
          %1895 = vmatpush1.msra.mxu0 %v1886
          %1896 = vmatprep.subr.mxu0 0.0
          %1897 = vmatpush1.msra.mxu0 %v1887
          %1898 = vmatprep.subr.mxu0 0.0
          %1899 = vmatpush1.msra.mxu0 %v1888
          %1900 = vmatprep.subr.mxu0 0.0
          %1901 = vmatpush1.msra.mxu0 %v1889
          %1902 = vmatprep.subr.mxu0 0.0
          %1903 = vmatpush1.msra.mxu0 0.0
          %1904 = vmatprep.subr.mxu0 0.0
          %1905 = vmatpush1.msra.mxu0 0.0
          %1906 = vmatprep.subr.mxu0 0.0
          %1907 = vmatpush1.msra.mxu0 0.0
          %1908 = vmatprep.subr.mxu0 0.0
          %1909 = vmatpush1.msra.mxu0 0.0
          %1910 = vmatprep.subr.mxu0 0.0
          %1911 = vmatpush1.msra.mxu0 0.0
          %1912 = vmatprep.subr.mxu0 0.0
          %1913 = vmatpush1.msra.mxu0 0.0
          %1914 = vmatprep.subr.mxu0 0.0
          %1915 = vmatpush1.msra.mxu0 0.0
          %1916 = vmatprep.subr.mxu0 0.0
          %1917 = vmatpush1.msra.mxu0 0.0
          %1918 = vmatprep.subr.mxu0 0.0
          %1919 = vmatpush1.msra.mxu0 0.0
          %1920 = vmatprep.subr.mxu0 0.0
          %1921 = vmatpush1.msra.mxu0 0.0
          %1922 = vmatprep.subr.mxu0 0.0
          %1923 = vmatpush1.msra.mxu0 0.0
          %1924 = vmatprep.subr.mxu0 0.0
          %1925 = vmatpush1.msra.mxu0 0.0
          %1926 = vmatprep.subr.mxu0 0.0
          %1927 = vmatpush1.msra.mxu0 0.0
          %1928 = vmatprep.subr.mxu0 0.0
          %1929 = vmatpush1.msra.mxu0 0.0
          %1930 = vmatprep.subr.mxu0 0.0
          %1931 = vmatpush1.msra.mxu0 0.0
          %1932 = vmatprep.subr.mxu0 0.0
          %1933 = vmatpush1.msra.mxu0 0.0
          %1934 = vmatprep.subr.mxu0 0.0
          %1935 = vmatpush1.msra.mxu0 0.0
          %1936 = vmatprep.subr.mxu0 0.0
          %1937 = vmatpush1.msra.mxu0 0.0
          %1938 = vmatprep.subr.mxu0 0.0
          %1939 = vmatpush1.msra.mxu0 0.0
          %1940 = vmatprep.subr.mxu0 0.0
          %1941 = vmatpush1.msra.mxu0 0.0
          %1942 = vmatprep.subr.mxu0 0.0
          %1943 = vmatpush1.msra.mxu0 0.0
          %1944 = vmatprep.subr.mxu0 0.0
          %1945 = vmatpush1.msra.mxu0 0.0
          %1946 = vmatprep.subr.mxu0 0.0
          %1947 = vmatpush1.msra.mxu0 0.0
          %1948 = vmatprep.subr.mxu0 0.0
          %1949 = vmatpush1.msra.mxu0 0.0
          %1950 = vmatprep.subr.mxu0 0.0
          %1951 = vmatpush1.msra.mxu0 0.0
          %1952 = vmatprep.subr.mxu0 0.0
          %1953 = vmatpush1.msra.mxu0 0.0
          %1954 = vmatprep.subr.mxu0 0.0
          %1955 = vmatpush1.msra.mxu0 0.0
          %1956 = vmatprep.subr.mxu0 0.0
          %1957 = vmatpush1.msra.mxu0 0.0
          %1958 = vmatprep.mubr.f32.mxu0 0.0
          %1959 = vmatmul.mubr.f32.gmra.mrb[0].mxu0 %v1892
          %v1960 = vpop.f32.mrb[0].mxu0
          %v1961 = vadd.f32 %v1890, %v1960
          %v1962 = vpop.f32.mrb[0].mxu0
          %1963 = vdwg.mxu0
          %1964 = vst.msk [vmem:[%s1250] sm:$0x1] %vm1581, %v1961
          %v1965 = vld [vmem:[#allocation38] sm:$0xff]
          %v1966 = vld [vmem:[#allocation38 + $0x8] sm:$0xff]
          %v1967 = vld [vmem:[#allocation38 + $0x10] sm:$0xff]
          %v1968 = vld [vmem:[#allocation38 + $0x18] sm:$0xff]
          %v1969 = vld [vmem:[#allocation39] sm:$0x1]
          %v1971 = vsel %vm1283, %v1961, 0
          %1973 = vmatprep.subr.mxu0 0.0
          %1974 = vmatpush1.msra.mxu0 %v1965
          %1975 = vmatprep.subr.mxu0 0.0
          %1976 = vmatpush1.msra.mxu0 %v1966
          %1977 = vmatprep.subr.mxu0 0.0
          %1978 = vmatpush1.msra.mxu0 %v1967
          %1979 = vmatprep.subr.mxu0 0.0
          %1980 = vmatpush1.msra.mxu0 %v1968
          %1981 = vmatprep.subr.mxu0 0.0
          %1982 = vmatpush1.msra.mxu0 0.0
          %1983 = vmatprep.subr.mxu0 0.0
          %1984 = vmatpush1.msra.mxu0 0.0
          %1985 = vmatprep.subr.mxu0 0.0
          %1986 = vmatpush1.msra.mxu0 0.0
          %1987 = vmatprep.subr.mxu0 0.0
          %1988 = vmatpush1.msra.mxu0 0.0
          %1989 = vmatprep.subr.mxu0 0.0
          %1990 = vmatpush1.msra.mxu0 0.0
          %1991 = vmatprep.subr.mxu0 0.0
          %1992 = vmatpush1.msra.mxu0 0.0
          %1993 = vmatprep.subr.mxu0 0.0
          %1994 = vmatpush1.msra.mxu0 0.0
          %1995 = vmatprep.subr.mxu0 0.0
          %1996 = vmatpush1.msra.mxu0 0.0
          %1997 = vmatprep.subr.mxu0 0.0
          %1998 = vmatpush1.msra.mxu0 0.0
          %1999 = vmatprep.subr.mxu0 0.0
          %2000 = vmatpush1.msra.mxu0 0.0
          %2001 = vmatprep.subr.mxu0 0.0
          %2002 = vmatpush1.msra.mxu0 0.0
          %2003 = vmatprep.subr.mxu0 0.0
          %2004 = vmatpush1.msra.mxu0 0.0
          %2005 = vmatprep.subr.mxu0 0.0
          %2006 = vmatpush1.msra.mxu0 0.0
          %2007 = vmatprep.subr.mxu0 0.0
          %2008 = vmatpush1.msra.mxu0 0.0
          %2009 = vmatprep.subr.mxu0 0.0
          %2010 = vmatpush1.msra.mxu0 0.0
          %2011 = vmatprep.subr.mxu0 0.0
          %2012 = vmatpush1.msra.mxu0 0.0
          %2013 = vmatprep.subr.mxu0 0.0
          %2014 = vmatpush1.msra.mxu0 0.0
          %2015 = vmatprep.subr.mxu0 0.0
          %2016 = vmatpush1.msra.mxu0 0.0
          %2017 = vmatprep.subr.mxu0 0.0
          %2018 = vmatpush1.msra.mxu0 0.0
          %2019 = vmatprep.subr.mxu0 0.0
          %2020 = vmatpush1.msra.mxu0 0.0
          %2021 = vmatprep.subr.mxu0 0.0
          %2022 = vmatpush1.msra.mxu0 0.0
          %2023 = vmatprep.subr.mxu0 0.0
          %2024 = vmatpush1.msra.mxu0 0.0
          %2025 = vmatprep.subr.mxu0 0.0
          %2026 = vmatpush1.msra.mxu0 0.0
          %2027 = vmatprep.subr.mxu0 0.0
          %2028 = vmatpush1.msra.mxu0 0.0
          %2029 = vmatprep.subr.mxu0 0.0
          %2030 = vmatpush1.msra.mxu0 0.0
          %2031 = vmatprep.subr.mxu0 0.0
          %2032 = vmatpush1.msra.mxu0 0.0
          %2033 = vmatprep.subr.mxu0 0.0
          %2034 = vmatpush1.msra.mxu0 0.0
          %2035 = vmatprep.subr.mxu0 0.0
          %2036 = vmatpush1.msra.mxu0 0.0
          %2037 = vmatprep.mubr.f32.mxu0 0.0
          %2038 = vmatmul.mubr.f32.gmra.mrb[0].mxu0 %v1971
          %v2039 = vpop.f32.mrb[0].mxu0
          %v2040 = vadd.f32 %v1969, %v2039
          %v2041 = vpop.f32.mrb[0].mxu0
          %2042 = vdwg.mxu0
          %vm2043 = vcmask 57344
          %2044 = vst.msk [vmem:[%s1256] sm:$0x1] %vm2043, %v2040
        $region204: #{tpu_custom_call.1} parent=107 // pred_fallthru
          _
        %s2045 = sand.u32 %s612, 1
        %s2046 = scalar_lea.sflag [#allocation8], %s2045
        %s2047 = sand.u32 %s612, 1
        %s2048 = scalar_lea.vmem [#allocation41], %s2047
        %s2049 = sand.u32 %s69, 1
        %s2050 = scalar_lea.sflag [#allocation43], %s2049
        %s2051 = sand.u32 %s638, 1
        %s2052 = scalar_lea.vmem [#allocation42], %s2051
        %s2053 = sand.u32 %s69, 1
        %s2054 = scalar_lea.sflag [#allocation43], %s2053
        %s2055 = sand.u32 %s664, 1
        %s2056 = scalar_lea.vmem [#allocation44], %s2055
        // Predicated region
        $region205: #{tpu_custom_call.1} parent=107 // pred_check
          %p2057 = pneg %p622
        $region206: #{tpu_custom_call.1} parent=107 // pred_check_branch
          %2059 = sbr.rel (%p2057) target = $region208
        $region207: #{tpu_custom_call.1} parent=107 // pred_region
          %s2061 = ssub.s32 16, 16
          %2062 = vsyncadd %s2046, %s2061
          %s2063 = smul.addr %s73, 16
          %s2064 = scalar_lea.hbm %s23, %s2063
          %s2066 = sshll.u32 %s2048, 4
          %s2067 = int_to_ptr.vmem [resolvable:$true] %s2066
          %2069 = dma.vmem_to_hbm [thread:$0]  %s2067, 16, %s2064, %s2046
        $region208: #{tpu_custom_call.1} parent=107 // pred_fallthru
          _
        // Predicated region
        $region209: #{tpu_custom_call.1} parent=107 // pred_check
          %p2070 = pneg %p648
        $region210: #{tpu_custom_call.1} parent=107 // pred_check_branch
          %2072 = sbr.rel (%p2070) target = $region212
        $region211: #{tpu_custom_call.1} parent=107 // pred_region
          %s2074 = ssub.s32 16, 16
          %2075 = vsyncadd %s2050, %s2074
          %s2076 = smul.addr %s73, 16
          %s2077 = scalar_lea.hbm %s24, %s2076
          %s2079 = sshll.u32 %s2052, 4
          %s2080 = int_to_ptr.vmem [resolvable:$true] %s2079
          %2082 = dma.vmem_to_hbm [thread:$0]  %s2080, 16, %s2077, %s2050
        $region212: #{tpu_custom_call.1} parent=107 // pred_fallthru
          _
        // Predicated region
        $region213: #{tpu_custom_call.1} parent=107 // pred_check
          %p2083 = pneg %p674
        $region214: #{tpu_custom_call.1} parent=107 // pred_check_branch
          %2085 = sbr.rel (%p2083) target = $region216
        $region215: #{tpu_custom_call.1} parent=107 // pred_region
          %s2087 = ssub.s32 16, 16
          %2088 = vsyncadd %s2054, %s2087
          %s2089 = smul.addr %s73, 16
          %s2090 = scalar_lea.hbm %s25, %s2089
          %s2092 = sshll.u32 %s2056, 4
          %s2093 = int_to_ptr.vmem [resolvable:$true] %s2092
          %2095 = dma.vmem_to_hbm [thread:$0]  %s2093, 16, %s2090, %s2054
        $region216: #{tpu_custom_call.1} parent=107 // pred_fallthru
          _
      $region108: #{tpu_custom_call.1} parent=5 // pred_fallthru
        _
      %p2096 = scmp.le.s32.totalorder 2, %s64
      // Predicated region
      $region217: #{tpu_custom_call.1} parent=5 // pred_check
        %p2097 = pneg %p2096
      $region218: #{tpu_custom_call.1} parent=5 // pred_check_branch
        %2099 = sbr.rel (%p2097) target = $region220
      $region219: #{tpu_custom_call.1} parent=5 // pred_region
        %s2100 = ssub.s32 %s64, 2
        // Predicated region
        $region221: #{tpu_custom_call.1} parent=219 // pred_check
          %p2101 = pneg %p628
        $region222: #{tpu_custom_call.1} parent=219 // pred_check_branch
          %2103 = sbr.rel (%p2101) target = $region224
        $region223: #{tpu_custom_call.1} parent=219 // pred_region
          %s2104 = sand.u32 %s613, 1
          %s2105 = scalar_lea.sflag [#allocation8], %s2104
          %s2106 = sand.u32 %s613, 1
          %s2107 = scalar_lea.vmem [#allocation41], %s2106
          %2108 = dma.done %s2105, 16
        $region224: #{tpu_custom_call.1} parent=219 // pred_fallthru
          _
        // Predicated region
        $region225: #{tpu_custom_call.1} parent=219 // pred_check
          %p2109 = pneg %p654
        $region226: #{tpu_custom_call.1} parent=219 // pred_check_branch
          %2111 = sbr.rel (%p2109) target = $region228
        $region227: #{tpu_custom_call.1} parent=219 // pred_region
          %s2112 = sand.u32 %s70, 1
          %s2113 = scalar_lea.sflag [#allocation43], %s2112
          %s2114 = sand.u32 %s639, 1
          %s2115 = scalar_lea.vmem [#allocation42], %s2114
          %2116 = dma.done %s2113, 16
        $region228: #{tpu_custom_call.1} parent=219 // pred_fallthru
          _
        // Predicated region
        $region229: #{tpu_custom_call.1} parent=219 // pred_check
          %p2117 = pneg %p680
        $region230: #{tpu_custom_call.1} parent=219 // pred_check_branch
          %2119 = sbr.rel (%p2117) target = $region232
        $region231: #{tpu_custom_call.1} parent=219 // pred_region
          %s2120 = sand.u32 %s70, 1
          %s2121 = scalar_lea.sflag [#allocation43], %s2120
          %s2122 = sand.u32 %s665, 1
          %s2123 = scalar_lea.vmem [#allocation44], %s2122
          %2124 = dma.done %s2121, 16
        $region232: #{tpu_custom_call.1} parent=219 // pred_fallthru
          _
      $region220: #{tpu_custom_call.1} parent=5 // pred_fallthru
        _
    $region6: #{tpu_custom_call.1} parent=1 // loop_footer
      %s68 = sadd.s32 1, %s64
    $region7: #{tpu_custom_call.1} parent=1 // loop_footer_branch
      %63 = sbr.rel target = $region3
    $region8: #{tpu_custom_call.1} parent=1 // loop_exit
      _
    %2125 = vsyncpa [#allocation7], 1
    %s2126 = scalar_lea.sflag [#allocation7], 1
    %2127 = vsyncpa %s2126, 1
    %2128 = vsyncpa [#allocation10], 1
    %s2129 = scalar_lea.sflag [#allocation10], 1
    %2130 = vsyncpa %s2129, 1
    %2131 = vsyncpa [#allocation13], 1
    %s2132 = scalar_lea.sflag [#allocation13], 1
    %2133 = vsyncpa %s2132, 1
    %2134 = vsyncpa [#allocation16], 1
    %s2135 = scalar_lea.sflag [#allocation16], 1
    %2136 = vsyncpa %s2135, 1
    %2137 = vsyncpa [#allocation19], 1
    %s2138 = scalar_lea.sflag [#allocation19], 1
    %2139 = vsyncpa %s2138, 1
    %2140 = vsyncpa [#allocation22], 1
    %2141 = vsyncpa [#allocation25], 1
    %2142 = vsyncpa [#allocation28], 1
    %2143 = vsyncpa [#allocation31], 1
    %2144 = vsyncpa [#allocation34], 1
    %2145 = vsyncpa [#allocation37], 1
    %2146 = vsyncpa [#allocation40], 1
    %2147 = vsyncpa [#allocation8], 1
    %s2148 = scalar_lea.sflag [#allocation8], 1
    %2149 = vsyncpa %s2148, 1
    %2150 = vsyncpa [#allocation43], 1
    %s2151 = scalar_lea.sflag [#allocation43], 1
    %2152 = vsyncpa %s2151, 1

</llo_original>
